<compile_context>
chip_gen: v7x
topology: tpu7x:2x2x1
jax: 0.10.0
libtpu: 0.0.40
codegen_flags: <defaults>
</compile_context>

<pallas_src>
import functools

import jax
import jax.numpy as jnp
from jax.experimental import pallas as pl
from jax.experimental.pallas import tpu as pltpu


def _round_up(x, m):
    return (x + m - 1) // m * m


def _softplus(y):
    # torch.nn.Softplus(beta=1, threshold=20): x if x > 20 else log(1 + exp(x))
    return jnp.where(y > 20.0, y, jnp.log1p(jnp.exp(jnp.minimum(y, 20.0))))


# ----------------------------------------------------------------------------
# Fused matmul + bias + (optional) softplus kernels
# ----------------------------------------------------------------------------
def _mm_single_k_kernel(x_ref, w_ref, b_ref, o_ref, *, apply_softplus):
    y = jnp.dot(x_ref[...], w_ref[...], preferred_element_type=jnp.float32)
    y = y + b_ref[...]
    if apply_softplus:
        y = _softplus(y)
    o_ref[...] = y.astype(o_ref.dtype)


def _mm_multi_k_kernel(x_ref, w_ref, b_ref, o_ref, acc_ref, *, apply_softplus):
    @pl.when(pl.program_id(2) == 0)
    def _():
        acc_ref[...] = jnp.zeros_like(acc_ref)

    acc_ref[...] += jnp.dot(x_ref[...], w_ref[...],
                            preferred_element_type=jnp.float32)

    @pl.when(pl.program_id(2) == pl.num_programs(2) - 1)
    def _():
        y = acc_ref[...] + b_ref[...]
        if apply_softplus:
            y = _softplus(y)
        o_ref[...] = y.astype(o_ref.dtype)


_TM_MAX = 256
_TK_MAX = 2048


def _pick_tiles(M, Kp, N):
    """Per-layer tile selection (M, Kp, N are static under jit)."""
    if M >= _TM_MAX:
        tm, Mp = _TM_MAX, M                 # ragged tail block; no padding copy
    else:
        tm = _round_up(max(M, 8), 8)        # tiny late layers: cover M in one block
        Mp = tm
    if Kp <= _TK_MAX:
        tk = Kp
    else:
        tk = next(t for t in range(_TK_MAX, 127, -128) if Kp % t == 0)
    tn = N
    # If the M grid collapsed to a single block (late, tiny layers), split N so at
    # least two parallel grid blocks remain (keeps both v7x TensorCores busy).
    if pl.cdiv(Mp, tm) == 1 and N > 128:
        nb = N // 128
        for d in range(nb // 2, 0, -1):
            if nb % d == 0:
                tn = d * 128
                break
    return tm, Mp, tk, tn


def matmul_bias_act(x, wm, b, *, apply_softplus, out_dtype):
    """act(x @ wm + b) with a tiled Pallas MXU kernel.

    x:  (M, K)  activations / im2col patches (any float dtype, cast to bf16)
    wm: (Kp, N) pre-transposed, pre-padded bf16 weights (Kp = round_up(K, 128))
    b:  (1, N)  f32 bias
    """
    M, K = x.shape
    Kp, N = wm.shape
    tm, Mp, tk, tn = _pick_tiles(M, Kp, N)

    xp = x if x.dtype == jnp.bfloat16 else x.astype(jnp.bfloat16)
    if Mp != M or Kp != K:
        # Only conv0 pads K (27 -> 128) and only tiny late layers pad M (to mult. of 8).
        xp = jnp.pad(xp, ((0, Mp - M), (0, Kp - K)))

    nk = Kp // tk
    grid = (pl.cdiv(Mp, tm), N // tn, nk)

    if nk == 1:
        kernel = functools.partial(_mm_single_k_kernel, apply_softplus=apply_softplus)
        scratch = []
    else:
        kernel = functools.partial(_mm_multi_k_kernel, apply_softplus=apply_softplus)
        scratch = [pltpu.VMEM((tm, tn), jnp.float32)]

    out = pl.pallas_call(
        kernel,
        out_shape=jax.ShapeDtypeStruct((Mp, N), out_dtype),
        grid_spec=pltpu.PrefetchScalarGridSpec(
            num_scalar_prefetch=0,
            grid=grid,
            in_specs=[
                pl.BlockSpec((tm, tk), lambda i, j, k: (i, k)),
                pl.BlockSpec((tk, tn), lambda i, j, k: (k, j)),
                pl.BlockSpec((1, tn), lambda i, j, k: (0, j)),
            ],
            out_specs=pl.BlockSpec((tm, tn), lambda i, j, k: (i, j)),
            scratch_shapes=scratch,
        ),
        compiler_params=pltpu.CompilerParams(
            dimension_semantics=("parallel", "parallel", "arbitrary"),
            vmem_limit_bytes=32 * 1024 * 1024,
        ),
    )(xp, wm, b)
    if Mp != M:
        out = out[:M]
    return out


# ----------------------------------------------------------------------------
# MaxPool2d(kernel_size=2) kernels
# ----------------------------------------------------------------------------
def _maxpool2x2_s1_kernel(x_ref, o_ref):
    x = x_ref[...]
    a = jnp.maximum(x[:, :-1, :-1, :], x[:, :-1, 1:, :])
    b = jnp.maximum(x[:, 1:, :-1, :], x[:, 1:, 1:, :])
    o_ref[...] = jnp.maximum(a, b).astype(o_ref.dtype)


def maxpool2_s1(x):
    n, h, w, c = x.shape
    return pl.pallas_call(
        _maxpool2x2_s1_kernel,
        out_shape=jax.ShapeDtypeStruct((n, h - 1, w - 1, c), x.dtype),
        grid=(n,),
        in_specs=[pl.BlockSpec((1, h, w, c), lambda i: (i, 0, 0, 0))],
        out_specs=pl.BlockSpec((1, h - 1, w - 1, c), lambda i: (i, 0, 0, 0)),
        compiler_params=pltpu.CompilerParams(dimension_semantics=("parallel",)),
    )(x)


def _maxpool2x2_s2_kernel(x_ref, o_ref):
    # x_ref: (1, h//2, 2, w//2, 2*c) -- the inner H-pair axis is 2, the W-pair is
    # folded into the lane axis as [w_even channels | w_odd channels].
    c = o_ref.shape[-1]
    x = x_ref[...]
    m = jnp.maximum(x[:, :, 0, :, :], x[:, :, 1, :, :])                    # max over H pair
    o_ref[...] = jnp.maximum(m[..., :c], m[..., c:]).astype(o_ref.dtype)   # max over W pair


def maxpool2_s2(x):
    n, h, w, c = x.shape
    h2, w2 = h // 2, w // 2
    xr = x.reshape(n, h2, 2, w2, 2 * c)   # free row-major regrouping in HBM
    return pl.pallas_call(
        _maxpool2x2_s2_kernel,
        out_shape=jax.ShapeDtypeStruct((n, h2, w2, c), x.dtype),
        grid=(n,),
        in_specs=[pl.BlockSpec((1, h2, 2, w2, 2 * c), lambda i: (i, 0, 0, 0, 0))],
        out_specs=pl.BlockSpec((1, h2, w2, c), lambda i: (i, 0, 0, 0)),
        compiler_params=pltpu.CompilerParams(dimension_semantics=("parallel",)),
    )(xr)


# ----------------------------------------------------------------------------
# Conv2d (valid, stride 1) + Softplus via im2col + the fused matmul kernel
# ----------------------------------------------------------------------------
def conv2d_softplus(x, wm, b, kh, kw):
    # x: (N, H, W, Cin) bf16; wm: (Kp, Cout) bf16, K ordered (kh, kw, cin); b: (1, Cout) f32
    n, h, w, cin = x.shape
    cout = wm.shape[1]
    oh, ow = h - kh + 1, w - kw + 1
    if kh == 1 and kw == 1:
        patches = x.reshape(n * h * w, cin)
    else:
        patches = jnp.concatenate(
            [x[:, i:i + oh, j:j + ow, :] for i in range(kh) for j in range(kw)],
            axis=-1).reshape(n * oh * ow, kh * kw * cin)
    y = matmul_bias_act(patches, wm, b, apply_softplus=True, out_dtype=jnp.bfloat16)
    return y.reshape(n, oh, ow, cout)


# ----------------------------------------------------------------------------
# Parameters (deterministic synthetic init, torch layout) + one-time preparation
# ----------------------------------------------------------------------------
def conv_specs(inputs):
    return [
        (384, inputs, 3), (384, 384, 1), (384, 384, 2), (640, 384, 2),
        (640, 640, 2), (640, 640, 1), (768, 640, 2), (768, 768, 2),
        (768, 768, 2), (768, 768, 1), (896, 768, 2), (896, 896, 2),
        (896, 896, 3), (1024, 896, 2), (1024, 1024, 2), (1024, 1024, 1),
        (1152, 1024, 2), (1152, 1152, 2),
    ]


def init_params(key, inputs, outputs):
    """Torch-layout parameters: conv (Cout, Cin, KH, KW)/(Cout,), linear (out, in)/(out,)."""
    specs = conv_specs(inputs)
    keys = jax.random.split(key, len(specs) + 2)
    convs = []
    for k, (cout, cin, ks) in zip(keys[:len(specs)], specs):
        fan_in = cin * ks * ks
        w = jax.random.normal(k, (cout, cin, ks, ks), jnp.float32) / jnp.sqrt(fan_in)
        b = jnp.zeros((cout,), jnp.float32)
        convs.append((w, b))
    lin_in = 2 * 2 * 1152
    lw = jax.random.normal(keys[-2], (outputs, lin_in), jnp.float32) / jnp.sqrt(lin_in)
    lb = 0.01 * jax.random.normal(keys[-1], (outputs,), jnp.float32)
    return tuple(convs), (lw, lb)


def prepare_params(torch_params):
    """One-time transform of torch-layout params into kernel-ready layout:
    transpose/reshape to (K, Cout), pad K to a multiple of 128, cast to bf16.
    Runs outside the jitted forward, so no per-call weight transforms remain."""
    convs, (lw, lb) = torch_params
    prepared = []
    for w, b in convs:
        cout, cin, kh, kw = w.shape
        K = kh * kw * cin
        Kp = _round_up(K, 128)
        wm = jnp.transpose(w, (2, 3, 1, 0)).reshape(K, cout)      # (kh, kw, cin) -> K order
        wm = jnp.pad(wm, ((0, Kp - K), (0, 0))).astype(jnp.bfloat16)
        prepared.append((wm, b.reshape(1, cout).astype(jnp.float32)))
    outputs, lin_in = lw.shape
    Np = _round_up(outputs, 128)
    lwm = jnp.pad(lw.T, ((0, 0), (0, Np - outputs))).astype(jnp.bfloat16)
    lbp = jnp.pad(lb, (0, Np - outputs)).reshape(1, Np).astype(jnp.float32)
    return tuple(prepared), (lwm, lbp)


# ----------------------------------------------------------------------------
# Forward pass
# ----------------------------------------------------------------------------
def elun1_forward(x_nchw, params, kernel_sizes, outputs):
    conv_params, (lwm, lb) = params
    x = jnp.transpose(x_nchw, (0, 2, 3, 1)).astype(jnp.bfloat16)   # NCHW -> NHWC, bf16

    def c(i, y):
        wm, b = conv_params[i]
        ks = kernel_sizes[i]
        return conv2d_softplus(y, wm, b, ks, ks)

    x = c(0, x)                                         # Conv 3x3 -> 384, Softplus
    x = maxpool2_s1(x)                                  # MaxPool 2, s1
    x = c(1, x); x = c(2, x); x = c(3, x); x = c(4, x)  # 1x1, 2x2, 2x2->640, 2x2
    x = maxpool2_s1(x)
    x = c(5, x); x = c(6, x); x = c(7, x); x = c(8, x)  # 1x1, 2x2->768, 2x2, 2x2
    x = maxpool2_s1(x)
    x = c(9, x); x = c(10, x); x = c(11, x)             # 1x1, 2x2->896, 2x2
    x = maxpool2_s1(x)
    x = c(12, x); x = c(13, x); x = c(14, x)            # 3x3, 2x2->1024, 2x2
    x = maxpool2_s1(x)
    x = c(15, x); x = c(16, x)                          # 1x1, 2x2->1152
    x = maxpool2_s2(x)                                  # MaxPool 2, s2
    x = c(17, x)                                        # 2x2
    x = maxpool2_s2(x)                                  # -> (N, 2, 2, 1152)

    # FlattenLayer(2*2*1152): torch flattens in NCHW order
    n = x.shape[0]
    x = jnp.transpose(x, (0, 3, 1, 2)).reshape(n, -1)
    # Linear: y = x @ W.T + b   (no activation); drop padded output columns
    y = matmul_bias_act(x, lwm, lb, apply_softplus=False, out_dtype=jnp.float32)
    return y[:, :outputs]


# ----------------------------------------------------------------------------
# Self-test of the kernels against pure-JAX references
# ----------------------------------------------------------------------------
def _self_test():
    key = jax.random.PRNGKey(1)
    k1, k2, k3, k4, k5 = jax.random.split(key, 5)

    # Fused matmul + softplus, ragged-M path (M not a multiple of tm), single K step.
    M, K, N = 300, 384, 256
    x = jax.random.normal(k1, (M, K), jnp.float32).astype(jnp.bfloat16)
    w = (jax.random.normal(k2, (K, N), jnp.float32) / jnp.sqrt(K)).astype(jnp.bfloat16)
    b = jax.random.normal(k3, (1, N), jnp.float32)
    got = matmul_bias_act(x, w, b, apply_softplus=True, out_dtype=jnp.float32)
    ref = _softplus(jnp.dot(x, w, preferred_element_type=jnp.float32) + b)
    assert jnp.allclose(got, ref, atol=5e-2, rtol=5e-2), "matmul+softplus mismatch"

    # Multi-K-step accumulation path, also ragged in M.
    M, K, N = 260, 2560, 384
    x = jax.random.normal(k4, (M, K), jnp.float32).astype(jnp.bfloat16)
    w = (jax.random.normal(k5, (K, N), jnp.float32) / jnp.sqrt(K)).astype(jnp.bfloat16)
    b = jnp.zeros((1, N), jnp.float32)
    got = matmul_bias_act(x, w, b, apply_softplus=False, out_dtype=jnp.float32)
    ref = jnp.dot(x, w, preferred_element_type=jnp.float32) + b
    assert jnp.allclose(got, ref, atol=5e-2, rtol=5e-2), "multi-K matmul mismatch"

    # MaxPool 2x2 stride 1.
    xp = jax.random.normal(k1, (2, 9, 9, 128), jnp.float32).astype(jnp.bfloat16)
    got = maxpool2_s1(xp)
    ref = jnp.maximum(jnp.maximum(xp[:, :-1, :-1], xp[:, :-1, 1:]),
                      jnp.maximum(xp[:, 1:, :-1], xp[:, 1:, 1:]))
    assert jnp.array_equal(got, ref), "maxpool s1 mismatch"

    # MaxPool 2x2 stride 2.
    xp = jax.random.normal(k2, (2, 6, 6, 128), jnp.float32).astype(jnp.bfloat16)
    got = maxpool2_s2(xp)
    ref = jnp.maximum(jnp.maximum(xp[:, 0::2, 0::2], xp[:, 0::2, 1::2]),
                      jnp.maximum(xp[:, 1::2, 0::2], xp[:, 1::2, 1::2]))
    assert jnp.array_equal(got, ref), "maxpool s2 mismatch"


if __name__ == "__main__":
    _self_test()

    key = jax.random.PRNGKey(0)
    pkey, xkey = jax.random.split(key)

    inputs, outputs, batch = 3, 10, 2
    # Spatial size must be 30x30 so the feature extractor ends at 2x2x1152,
    # matching the classifier's FlattenLayer(2*2*1152).
    x = jax.random.normal(xkey, (batch, inputs, 30, 30), jnp.float32)

    torch_params = init_params(pkey, inputs, outputs)
    params = jax.block_until_ready(prepare_params(torch_params))

    ksizes = tuple(s[2] for s in conv_specs(inputs))
    fwd = jax.jit(functools.partial(elun1_forward, kernel_sizes=ksizes, outputs=outputs))
    y = jax.block_until_ready(fwd(x, params))

    assert y.shape == (batch, outputs), y.shape
    assert jnp.all(jnp.isfinite(y))
    print("KERNEL_OK")
</pallas_src>

<mosaic_0001>
module attributes {stable_mosaic.version = 11 : i64} {
  func.func @_mm_single_k_kernel(%arg0: i32, %arg1: i32, %arg2: i32, %arg3: memref<256x384xbf16, #tpu.memory_space<vmem>>, %arg4: memref<384x256xbf16, #tpu.memory_space<vmem>>, %arg5: memref<1x256xf32, #tpu.memory_space<vmem>>, %arg6: memref<256x256xf32, #tpu.memory_space<vmem>>) attributes {dimension_semantics = [#tpu.dimension_semantics<parallel>, #tpu.dimension_semantics<parallel>, #tpu.dimension_semantics<arbitrary>], iteration_bounds = array<i64: 2, 1, 1>, scalar_prefetch = 0 : i64, scratch_operands = 0 : i64, tpu.core_type = #tpu.core_type<tc>, window_params = [{transform_indices = @transform_0, window_bounds = array<i64: 256, 384>}, {transform_indices = @transform_1, window_bounds = array<i64: 384, 256>}, {transform_indices = @transform_2, window_bounds = array<i64: 1, 256>}, {transform_indices = @transform_3, window_bounds = array<i64: 256, 256>}]} {
    %c0 = arith.constant 0 : index
    %c0_0 = arith.constant 0 : index
    %0 = vector.load %arg3[%c0, %c0_0] : memref<256x384xbf16, #tpu.memory_space<vmem>>, vector<256x384xbf16>
    %c0_1 = arith.constant 0 : index
    %c0_2 = arith.constant 0 : index
    %1 = vector.load %arg4[%c0_1, %c0_2] : memref<384x256xbf16, #tpu.memory_space<vmem>>, vector<384x256xbf16>
    %cst = arith.constant dense<0.000000e+00> : vector<256x256xf32>
    %2 = tpu.matmul %0, %1, %cst {dimension_numbers = #tpu.dot_dimension_numbers<[1], [0], [0], [1], [0, 0, 1, 1], [], []>} : vector<256x384xbf16>, vector<384x256xbf16>, vector<256x256xf32> -> vector<256x256xf32>
    %c0_3 = arith.constant 0 : index
    %c0_4 = arith.constant 0 : index
    %3 = vector.load %arg5[%c0_3, %c0_4] : memref<1x256xf32, #tpu.memory_space<vmem>>, vector<1x256xf32>
    %4 = vector.broadcast %3 : vector<1x256xf32> to vector<256x256xf32>
    %5 = arith.addf %2, %4 : vector<256x256xf32>
    %cst_5 = arith.constant 2.000000e+01 : f32
    %6 = vector.broadcast %cst_5 : f32 to vector<256x256xf32>
    %7 = arith.cmpf ogt, %5, %6 : vector<256x256xf32>
    %cst_6 = arith.constant 2.000000e+01 : f32
    %8 = vector.broadcast %cst_6 : f32 to vector<256x256xf32>
    %9 = arith.minimumf %5, %8 : vector<256x256xf32>
    %10 = math.exp %9 : vector<256x256xf32>
    %11 = math.log1p %10 : vector<256x256xf32>
    %12 = arith.select %7, %5, %11 : vector<256x256xi1>, vector<256x256xf32>
    %c0_7 = arith.constant 0 : index
    %c0_8 = arith.constant 0 : index
    %13 = vector.load %arg6[%c0_7, %c0_8] : memref<256x256xf32, #tpu.memory_space<vmem>>, vector<256x256xf32>
    tpu.vector_store %arg6[%c0_7, %c0_8], %12 {strides = array<i32>} : memref<256x256xf32, #tpu.memory_space<vmem>>, vector<256x256xf32>,
    return
  }
  func.func @transform_0(%arg0: i32, %arg1: i32, %arg2: i32) -> (i32, i32) {
    %c0_i32 = arith.constant 0 : i32
    return %arg0, %arg2 : i32, i32
  }
  func.func @transform_1(%arg0: i32, %arg1: i32, %arg2: i32) -> (i32, i32) {
    %c0_i32 = arith.constant 0 : i32
    return %arg2, %arg1 : i32, i32
  }
  func.func @transform_2(%arg0: i32, %arg1: i32, %arg2: i32) -> (i32, i32) {
    %c0_i32 = arith.constant 0 : i32
    %c0_i32_0 = arith.constant 0 : i32
    return %c0_i32, %arg1 : i32, i32
  }
  func.func @transform_3(%arg0: i32, %arg1: i32, %arg2: i32) -> (i32, i32) {
    %c0_i32 = arith.constant 0 : i32
    return %arg0, %arg1 : i32, i32
  }
}

</mosaic_0001>

<llo_original>
// kernel: tpu_custom_call.1
$region0: #{tpu_custom_call.1}
  #allocation0 [shape = 'u32[]', space=smem, size = 0x4, offset = 0x4, fixed_abs, tag = 'smem constant byte address 0x4 - core index']
  #allocation1 [shape = 'u32[144,128]{1,0:T(1,128)}', space=vmem, size = 0x12000, scoped, tag = 'internal scratch']
  %s0 = inlined_call_operand.hbm [shape: bf16[300,384], index: 0, kind: input, shape index: {}]
  %s1 = inlined_call_operand.hbm [shape: bf16[384,256], index: 1, kind: input, shape index: {}]
  %s2 = inlined_call_operand.vmem [shape: f32[1,256], index: 2, kind: input, shape index: {}]
  %s3 = inlined_call_operand.hbm [shape: f32[300,256], index: 3, kind: output, shape index: {}]
  %s4 = sld [smem:[#allocation0]]
  $region53: #{tpu_custom_call.1} parent=0
    _
  %s6 = ssub.s32 1, %s4
  %s7 = scalar_select 0, %s6, %s4
  $region1: #{tpu_custom_call.1} parent=0
    #allocation2 [shape = 'u8[393216]{0}', space=vmem, size = 0x60000, scoped, tag = 'input window, operand 0']
    #allocation3 [shape = 's32[2]{0}', space=sflag, size = 0x8, scoped, tag = 'scoped memory for tpu_custom_call.1']
    #allocation4 [shape = 's32[2]{0}', space=sflag, size = 0x8, scoped, tag = 'scoped memory for tpu_custom_call.1']
    #allocation5 [shape = 'u8[196608]{0}', space=vmem, size = 0x30000, scoped, tag = 'input window, operand 1, single buffered']
    #allocation6 [shape = 's32[1]{0}', space=sflag, size = 0x4, scoped, tag = 'scoped memory for tpu_custom_call.1']
    #allocation7 [shape = 'u8[524288]{0}', space=vmem, size = 0x80000, scoped, tag = 'output window, operand 0']
    %8 = vsyncpa [#allocation3], 0
    %s9 = scalar_lea.sflag [#allocation3], 1
    %10 = vsyncpa %s9, 0
    %11 = vsyncpa [#allocation6], 0
    %12 = vsyncpa [#allocation4], 0
    %s13 = scalar_lea.sflag [#allocation4], 1
    %14 = vsyncpa %s13, 0
    loop: start=0, step=1, limit=4
    $region2: #{tpu_custom_call.1} parent=1 // loop_pre_header
      _
    $region3: #{tpu_custom_call.1} parent=1 // loop_header
      %s16 = sphi 0, %s20
      %p17 = scmp.ge.s32.totalorder %s16, 4
      %s23 = sphi 0, %s42
      %s24 = sphi 0, %s38
      %s25 = sphi 0, %s34
      %s26 = sphi 0, %s23
      %s27 = sphi 0, %s24
      %s28 = sphi 0, %s25
      %s29 = sphi 0, %s26
      %s30 = sphi 0, %s27
      %s31 = sphi 0, %s28
      %s47 = sphi 0, %s49
      %s50 = sphi 0, %s47
      %s51 = sphi 0, %s50
      %s67 = sphi 0, %s51
      %s75 = sphi 0, %s77
      %s78 = sphi 0, %s75
      %s79 = sphi 0, %s78
      %s95 = sphi 0, %s79
      %s101 = sphi 0, %s103
      %s104 = sphi 0, %s101
      %s105 = sphi 0, %s104
      %s121 = sphi 0, %s105
      %s129 = sphi 0, %s131
      %s132 = sphi 0, %s129
      %s133 = sphi 0, %s132
      %s149 = sphi 0, %s133
    $region4: #{tpu_custom_call.1} parent=1 // loop_header_branch
      %19 = sbr.rel (%p17) target = $region8
    $region5: #{tpu_custom_call.1} parent=1 // loop_body
      %s21 = ssub.s32 %s16, 1
      %s22 = ssub.s32 %s16, 2
      %s32 = sadd.s32 1, %s25
      %p33 = scmp.ge.s32.totalorder %s32, 1
      %s34 = scalar_select %p33, 0, %s32
      %s35 = sadd.s32 1, %s24
      %s36 = scalar_select %p33, %s35, %s24
      %p37 = scmp.ge.s32.totalorder %s36, 1
      %s38 = scalar_select %p37, 0, %s36
      %s39 = sadd.s32 1, %s23
      %s40 = scalar_select %p37, %s39, %s23
      %p41 = scmp.ge.s32.totalorder %s40, 2
      %s42 = scalar_select %p41, 0, %s40
      %s43 = ssub.s32 %s23, %s42
      %s44 = ssub.s32 %s25, %s34
      %s45 = sor.u32 %s43, %s44
      %p46 = scmp.eq.s32.totalorder %s45, 0
      %s48 = sadd.s32 %s47, 1
      %s49 = scalar_select %p46, %s47, %s48
      %p52 = pneg %p46
      %p53 = scmp.eq.s32.totalorder %s16, 1
      %p54 = por %p52, %p53
      %p55 = scmp.ne.s32.totalorder %s47, %s50
      %p56 = scmp.eq.s32.totalorder %s16, 0
      %p57 = por %p55, %p56
      %p58 = scmp.ne.s32.totalorder %s47, %s50
      %p59 = scmp.eq.s32.totalorder %s21, 1
      %p60 = por %p58, %p59
      %p61 = scmp.ne.s32.totalorder %s50, %s51
      %p62 = scmp.eq.s32.totalorder %s21, 0
      %p63 = por %p61, %p62
      %p64 = scmp.ne.s32.totalorder %s50, %s51
      %p65 = scmp.eq.s32.totalorder %s22, 1
      %p66 = por %p64, %p65
      %p68 = scmp.ne.s32.totalorder %s51, %s67
      %p69 = scmp.eq.s32.totalorder %s22, 0
      %p70 = por %p68, %p69
      %s71 = ssub.s32 %s25, %s34
      %s72 = ssub.s32 %s24, %s38
      %s73 = sor.u32 %s71, %s72
      %p74 = scmp.eq.s32.totalorder %s73, 0
      %s76 = sadd.s32 %s75, 1
      %s77 = scalar_select %p74, %s75, %s76
      %p80 = pneg %p74
      %p81 = scmp.eq.s32.totalorder %s16, 1
      %p82 = por %p80, %p81
      %p83 = scmp.ne.s32.totalorder %s75, %s78
      %p84 = scmp.eq.s32.totalorder %s16, 0
      %p85 = por %p83, %p84
      %p86 = scmp.ne.s32.totalorder %s75, %s78
      %p87 = scmp.eq.s32.totalorder %s21, 1
      %p88 = por %p86, %p87
      %p89 = scmp.ne.s32.totalorder %s78, %s79
      %p90 = scmp.eq.s32.totalorder %s21, 0
      %p91 = por %p89, %p90
      %p92 = scmp.ne.s32.totalorder %s78, %s79
      %p93 = scmp.eq.s32.totalorder %s22, 1
      %p94 = por %p92, %p93
      %p96 = scmp.ne.s32.totalorder %s79, %s95
      %p97 = scmp.eq.s32.totalorder %s22, 0
      %p98 = por %p96, %p97
      %s99 = ssub.s32 %s24, %s38
      %p100 = scmp.eq.s32.totalorder %s99, 0
      %s102 = sadd.s32 %s101, 1
      %s103 = scalar_select %p100, %s101, %s102
      %p106 = pneg %p100
      %p107 = scmp.eq.s32.totalorder %s16, 1
      %p108 = por %p106, %p107
      %p109 = scmp.ne.s32.totalorder %s101, %s104
      %p110 = scmp.eq.s32.totalorder %s16, 0
      %p111 = por %p109, %p110
      %p112 = scmp.ne.s32.totalorder %s101, %s104
      %p113 = scmp.eq.s32.totalorder %s21, 1
      %p114 = por %p112, %p113
      %p115 = scmp.ne.s32.totalorder %s104, %s105
      %p116 = scmp.eq.s32.totalorder %s21, 0
      %p117 = por %p115, %p116
      %p118 = scmp.ne.s32.totalorder %s104, %s105
      %p119 = scmp.eq.s32.totalorder %s22, 1
      %p120 = por %p118, %p119
      %p122 = scmp.ne.s32.totalorder %s105, %s121
      %p123 = scmp.eq.s32.totalorder %s22, 0
      %p124 = por %p122, %p123
      %s125 = ssub.s32 %s23, %s42
      %s126 = ssub.s32 %s24, %s38
      %s127 = sor.u32 %s125, %s126
      %p128 = scmp.eq.s32.totalorder %s127, 0
      %s130 = sadd.s32 %s129, 1
      %s131 = scalar_select %p128, %s129, %s130
      %p134 = pneg %p128
      %p135 = scmp.eq.s32.totalorder %s16, 1
      %p136 = por %p134, %p135
      %p137 = scmp.ne.s32.totalorder %s129, %s132
      %p138 = scmp.eq.s32.totalorder %s16, 0
      %p139 = por %p137, %p138
      %p140 = scmp.ne.s32.totalorder %s129, %s132
      %p141 = scmp.eq.s32.totalorder %s21, 1
      %p142 = por %p140, %p141
      %p143 = scmp.ne.s32.totalorder %s132, %s133
      %p144 = scmp.eq.s32.totalorder %s21, 0
      %p145 = por %p143, %p144
      %p146 = scmp.ne.s32.totalorder %s132, %s133
      %p147 = scmp.eq.s32.totalorder %s22, 1
      %p148 = por %p146, %p147
      %p150 = scmp.ne.s32.totalorder %s133, %s149
      %p151 = scmp.eq.s32.totalorder %s22, 0
      %p152 = por %p150, %p151
      %p153 = scmp.le.s32.totalorder 1, %s16
      %p154 = scmp.lt.s32.totalorder %s16, 3
      %p155 = pnand %p153, %p154
      %p156 = pneg %p155
      // Predicated region
      $region9: #{tpu_custom_call.1} parent=5 // pred_check
        _
      $region10: #{tpu_custom_call.1} parent=5 // pred_check_branch
        %158 = sbr.rel (%p155) target = $region12
      $region11: #{tpu_custom_call.1} parent=5 // pred_region
        %s159 = ssub.s32 %s16, 1
        // Predicated region
        $region13: #{tpu_custom_call.1} parent=11 // pred_check
          %p160 = pneg %p91
        $region14: #{tpu_custom_call.1} parent=11 // pred_check_branch
          %162 = sbr.rel (%p160) target = $region16
        $region15: #{tpu_custom_call.1} parent=11 // pred_region
          %s163 = smul.u32 48, %s28
          %s164 = smul.u32 2, %s27
          %s166 = ssub.s32 6144, 6144
          %167 = vsyncadd [#allocation6], %s166
          %s168 = smul.addr %s163, 2
          %s169 = sadd.s32 %s164, %s168
          %s170 = smul.addr %s169, 64
          %s171 = scalar_lea.hbm %s1, %s170
          %s172 = sshll.u32 [#allocation5], 4
          %s173 = int_to_ptr.vmem [resolvable:$true] %s172
          %178 = dma.hbm_to_vmem [thread:$0]  %s171, 6144, %s173, [#allocation6], 128, 128, 8
        $region16: #{tpu_custom_call.1} parent=11 // pred_fallthru
          _
        // Predicated region
        $region17: #{tpu_custom_call.1} parent=11 // pred_check
          %p179 = pneg %p117
        $region18: #{tpu_custom_call.1} parent=11 // pred_check_branch
          %181 = sbr.rel (%p179) target = $region20
        $region19: #{tpu_custom_call.1} parent=11 // pred_region
          %s182 = smul.u32 2, %s27
          %p183 = scmp.lt.s32.totalorder %s182, 1
          %s184 = scalar_select %p183, %s182, 1
          %s185 = scalar_lea.vmem %s2, %s184
          %s186 = smul.u32 2, %s27
        $region20: #{tpu_custom_call.1} parent=11 // pred_fallthru
          _
      $region12: #{tpu_custom_call.1} parent=5 // pred_fallthru
        _
      %p187 = scmp.lt.s32.totalorder %s16, 2
      // Predicated region
      $region21: #{tpu_custom_call.1} parent=5 // pred_check
        %p188 = pneg %p187
      $region22: #{tpu_custom_call.1} parent=5 // pred_check_branch
        %190 = sbr.rel (%p188) target = $region24
      $region23: #{tpu_custom_call.1} parent=5 // pred_region
        // Predicated region
        $region25: #{tpu_custom_call.1} parent=23 // pred_check
          %p191 = pneg %p57
        $region26: #{tpu_custom_call.1} parent=23 // pred_check_branch
          %193 = sbr.rel (%p191) target = $region28
        $region27: #{tpu_custom_call.1} parent=23 // pred_region
          %s194 = sand.u32 %s47, 1
          %s195 = scalar_lea.sflag [#allocation3], %s194
          %s196 = sand.u32 %s47, 1
          %s197 = smul.addr %s196, 384
          %s198 = scalar_lea.vmem [#allocation2], %s197
          %s199 = smul.u32 32, %s23
          %s200 = smul.u32 3, %s25
          %s201 = ssub.s32 38, %s199
          %p202 = scmp.lt.s32.totalorder %s201, 32
          %s203 = scalar_select %p202, %s201, 32
          %s204 = smul.u32 64, %s203
          %s205 = smul.u32 %s204, 3
          %s207 = ssub.s32 6144, %s205
          %208 = vsyncadd %s195, %s207
          %p209 = scmp.ne.s32.totalorder 0, %s205
          %s210 = smul.addr %s199, 3
          %s211 = sadd.s32 %s200, %s210
          %s212 = smul.addr %s211, 64
          %s213 = scalar_lea.hbm %s0, %s212
          %s214 = smul.u32 12, %s203
          %s215 = sshll.u32 %s198, 4
          %s216 = int_to_ptr.vmem [resolvable:$true] %s215
          %s217 = sshll.u32 %s214, 4
          %221 = dma.hbm_to_vmem [thread:$0]  (%p209), %s213, %s217, %s216, %s195, 192, 192, 12
        $region28: #{tpu_custom_call.1} parent=23 // pred_fallthru
          _
      $region24: #{tpu_custom_call.1} parent=5 // pred_fallthru
        _
      %p222 = scmp.le.s32.totalorder 1, %s16
      %p223 = scmp.lt.s32.totalorder %s16, 3
      %p224 = pnand %p222, %p223
      %p225 = pneg %p224
      // Predicated region
      $region29: #{tpu_custom_call.1} parent=5 // pred_check
        _
      $region30: #{tpu_custom_call.1} parent=5 // pred_check_branch
        %227 = sbr.rel (%p224) target = $region32
      $region31: #{tpu_custom_call.1} parent=5 // pred_region
        %s228 = ssub.s32 %s16, 1
        %s229 = sand.u32 %s50, 1
        %s230 = scalar_lea.sflag [#allocation3], %s229
        %s231 = sand.u32 %s50, 1
        %s232 = smul.addr %s231, 384
        %s233 = scalar_lea.vmem [#allocation2], %s232
        // Predicated region
        $region33: #{tpu_custom_call.1} parent=31 // pred_check
          %p234 = pneg %p63
        $region34: #{tpu_custom_call.1} parent=31 // pred_check_branch
          %236 = sbr.rel (%p234) target = $region36
        $region35: #{tpu_custom_call.1} parent=31 // pred_region
          %237 = dma.done %s230, 6144
        $region36: #{tpu_custom_call.1} parent=31 // pred_fallthru
          _
        // Predicated region
        $region37: #{tpu_custom_call.1} parent=31 // pred_check
          %p238 = pneg %p91
        $region38: #{tpu_custom_call.1} parent=31 // pred_check_branch
          %240 = sbr.rel (%p238) target = $region40
        $region39: #{tpu_custom_call.1} parent=31 // pred_region
          %241 = dma.done [#allocation6], 6144
        $region40: #{tpu_custom_call.1} parent=31 // pred_fallthru
          _
        %s242 = sand.u32 %s50, 1
        %s243 = scalar_lea.sflag [#allocation3], %s242
        %s244 = sand.u32 %s50, 1
        %s245 = smul.addr %s244, 384
        %s246 = scalar_lea.vmem [#allocation2], %s245
        %p247 = pneg %p63
        %p248 = pneg %p60
        %p249 = pneg %p91
        %p250 = pneg %p88
        %s251 = smul.u32 2, %s27
        %p252 = scmp.lt.s32.totalorder %s251, 1
        %s253 = scalar_select %p252, %s251, 1
        %s254 = scalar_lea.vmem %s2, %s253
        %p255 = pneg %p117
        %p256 = pneg %p114
        %p257 = pneg %p145
        %p258 = pneg %p142
        %s259 = sand.u32 %s132, 1
        %s260 = scalar_lea.sflag [#allocation4], %s259
        %s261 = sand.u32 %s132, 1
        %s262 = smul.addr %s261, 512
        %s263 = scalar_lea.vmem [#allocation7], %s262
        %s264 = smul.u32 32, %s26
        %s265 = smul.u32 3, %s28
        %s266 = ssub.s32 38, %s264
        %p267 = scmp.lt.s32.totalorder %s266, 32
        %s268 = scalar_select %p267, %s266, 32
        %s269 = smul.u32 64, %s268
        %s270 = smul.u32 %s269, 3
        %s271 = smul.u32 48, %s28
        %s272 = smul.u32 2, %s27
        %s273 = smul.u32 2, %s27
        %p274 = scmp.lt.s32.totalorder %s273, 1
        %s275 = scalar_select %p274, %s273, 1
        %s276 = scalar_lea.vmem %s2, %s275
        %s277 = smul.u32 2, %s27
        %s278 = smul.u32 32, %s26
        %s279 = smul.u32 2, %s27
        %s280 = ssub.s32 38, %s278
        %p281 = scmp.lt.s32.totalorder %s280, 32
        %s282 = scalar_select %p281, %s280, 32
        %s283 = smul.u32 128, %s282
        %s284 = smul.u32 %s283, 2
        %v286 = vld [vmem:[%s233] sm:$0xff]
        %v287 = vld [vmem:[%s233 + $0x8] sm:$0xf]
        %v288 = vld [vmem:[%s233 + $0xc] sm:$0xff]
        %v289 = vld [vmem:[%s233 + $0x14] sm:$0xf]
        %v290 = vld [vmem:[%s233 + $0x18] sm:$0xff]
        %v291 = vld [vmem:[%s233 + $0x20] sm:$0xf]
        %v292 = vld [vmem:[%s233 + $0x24] sm:$0xff]
        %v293 = vld [vmem:[%s233 + $0x2c] sm:$0xf]
        %v294 = vld [vmem:[%s233 + $0x30] sm:$0xff]
        %v295 = vld [vmem:[%s233 + $0x38] sm:$0xf]
        %v296 = vld [vmem:[%s233 + $0x3c] sm:$0xff]
        %v297 = vld [vmem:[%s233 + $0x44] sm:$0xf]
        %v298 = vld [vmem:[%s233 + $0x48] sm:$0xff]
        %v299 = vld [vmem:[%s233 + $0x50] sm:$0xf]
        %v300 = vld [vmem:[%s233 + $0x54] sm:$0xff]
        %v301 = vld [vmem:[%s233 + $0x5c] sm:$0xf]
        %v302 = vld [vmem:[%s233 + $0x60] sm:$0xff]
        %v303 = vld [vmem:[%s233 + $0x68] sm:$0xf]
        %v304 = vld [vmem:[%s233 + $0x6c] sm:$0xff]
        %v305 = vld [vmem:[%s233 + $0x74] sm:$0xf]
        %v306 = vld [vmem:[%s233 + $0x78] sm:$0xff]
        %v307 = vld [vmem:[%s233 + $0x80] sm:$0xf]
        %v308 = vld [vmem:[%s233 + $0x84] sm:$0xff]
        %v309 = vld [vmem:[%s233 + $0x8c] sm:$0xf]
        %v310 = vld [vmem:[%s233 + $0x90] sm:$0xff]
        %v311 = vld [vmem:[%s233 + $0x98] sm:$0xf]
        %v312 = vld [vmem:[%s233 + $0x9c] sm:$0xff]
        %v313 = vld [vmem:[%s233 + $0xa4] sm:$0xf]
        %v314 = vld [vmem:[%s233 + $0xa8] sm:$0xff]
        %v315 = vld [vmem:[%s233 + $0xb0] sm:$0xf]
        %v316 = vld [vmem:[%s233 + $0xb4] sm:$0xff]
        %v317 = vld [vmem:[%s233 + $0xbc] sm:$0xf]
        %v318 = vld [vmem:[%s233 + $0xc0] sm:$0xff]
        %v319 = vld [vmem:[%s233 + $0xc8] sm:$0xf]
        %v320 = vld [vmem:[%s233 + $0xcc] sm:$0xff]
        %v321 = vld [vmem:[%s233 + $0xd4] sm:$0xf]
        %v322 = vld [vmem:[%s233 + $0xd8] sm:$0xff]
        %v323 = vld [vmem:[%s233 + $0xe0] sm:$0xf]
        %v324 = vld [vmem:[%s233 + $0xe4] sm:$0xff]
        %v325 = vld [vmem:[%s233 + $0xec] sm:$0xf]
        %v326 = vld [vmem:[%s233 + $0xf0] sm:$0xff]
        %v327 = vld [vmem:[%s233 + $0xf8] sm:$0xf]
        %v328 = vld [vmem:[%s233 + $0xfc] sm:$0xff]
        %v329 = vld [vmem:[%s233 + $0x104] sm:$0xf]
        %v330 = vld [vmem:[%s233 + $0x108] sm:$0xff]
        %v331 = vld [vmem:[%s233 + $0x110] sm:$0xf]
        %v332 = vld [vmem:[%s233 + $0x114] sm:$0xff]
        %v333 = vld [vmem:[%s233 + $0x11c] sm:$0xf]
        %v334 = vld [vmem:[%s233 + $0x120] sm:$0xff]
        %v335 = vld [vmem:[%s233 + $0x128] sm:$0xf]
        %v336 = vld [vmem:[%s233 + $0x12c] sm:$0xff]
        %v337 = vld [vmem:[%s233 + $0x134] sm:$0xf]
        %v338 = vld [vmem:[%s233 + $0x138] sm:$0xff]
        %v339 = vld [vmem:[%s233 + $0x140] sm:$0xf]
        %v340 = vld [vmem:[%s233 + $0x144] sm:$0xff]
        %v341 = vld [vmem:[%s233 + $0x14c] sm:$0xf]
        %v342 = vld [vmem:[%s233 + $0x150] sm:$0xff]
        %v343 = vld [vmem:[%s233 + $0x158] sm:$0xf]
        %v344 = vld [vmem:[%s233 + $0x15c] sm:$0xff]
        %v345 = vld [vmem:[%s233 + $0x164] sm:$0xf]
        %v346 = vld [vmem:[%s233 + $0x168] sm:$0xff]
        %v347 = vld [vmem:[%s233 + $0x170] sm:$0xf]
        %v348 = vld [vmem:[%s233 + $0x174] sm:$0xff]
        %v349 = vld [vmem:[%s233 + $0x17c] sm:$0xf]
        %v350 = vld [vmem:[#allocation5] sm:$0xff]
        %v351 = vld [vmem:[#allocation5 + $0x8] sm:$0xff]
        %v352 = vld [vmem:[#allocation5 + $0x10] sm:$0xff]
        %v353 = vld [vmem:[#allocation5 + $0x18] sm:$0xff]
        %v354 = vld [vmem:[#allocation5 + $0x20] sm:$0xff]
        %v355 = vld [vmem:[#allocation5 + $0x28] sm:$0xff]
        %v356 = vld [vmem:[#allocation5 + $0x30] sm:$0xff]
        %v357 = vld [vmem:[#allocation5 + $0x38] sm:$0xff]
        %v358 = vld [vmem:[#allocation5 + $0x40] sm:$0xff]
        %v359 = vld [vmem:[#allocation5 + $0x48] sm:$0xff]
        %v360 = vld [vmem:[#allocation5 + $0x50] sm:$0xff]
        %v361 = vld [vmem:[#allocation5 + $0x58] sm:$0xff]
        %v362 = vld [vmem:[#allocation5 + $0x60] sm:$0xff]
        %v363 = vld [vmem:[#allocation5 + $0x68] sm:$0xff]
        %v364 = vld [vmem:[#allocation5 + $0x70] sm:$0xff]
        %v365 = vld [vmem:[#allocation5 + $0x78] sm:$0xff]
        %v366 = vld [vmem:[#allocation5 + $0x80] sm:$0xff]
        %v367 = vld [vmem:[#allocation5 + $0x88] sm:$0xff]
        %v368 = vld [vmem:[#allocation5 + $0x90] sm:$0xff]
        %v369 = vld [vmem:[#allocation5 + $0x98] sm:$0xff]
        %v370 = vld [vmem:[#allocation5 + $0xa0] sm:$0xff]
        %v371 = vld [vmem:[#allocation5 + $0xa8] sm:$0xff]
        %v372 = vld [vmem:[#allocation5 + $0xb0] sm:$0xff]
        %v373 = vld [vmem:[#allocation5 + $0xb8] sm:$0xff]
        %v374 = vld [vmem:[#allocation5 + $0xc0] sm:$0xff]
        %v375 = vld [vmem:[#allocation5 + $0xc8] sm:$0xff]
        %v376 = vld [vmem:[#allocation5 + $0xd0] sm:$0xff]
        %v377 = vld [vmem:[#allocation5 + $0xd8] sm:$0xff]
        %v378 = vld [vmem:[#allocation5 + $0xe0] sm:$0xff]
        %v379 = vld [vmem:[#allocation5 + $0xe8] sm:$0xff]
        %v380 = vld [vmem:[#allocation5 + $0xf0] sm:$0xff]
        %v381 = vld [vmem:[#allocation5 + $0xf8] sm:$0xff]
        %v382 = vld [vmem:[#allocation5 + $0x100] sm:$0xff]
        %v383 = vld [vmem:[#allocation5 + $0x108] sm:$0xff]
        %v384 = vld [vmem:[#allocation5 + $0x110] sm:$0xff]
        %v385 = vld [vmem:[#allocation5 + $0x118] sm:$0xff]
        %v386 = vld [vmem:[#allocation5 + $0x120] sm:$0xff]
        %v387 = vld [vmem:[#allocation5 + $0x128] sm:$0xff]
        %v388 = vld [vmem:[#allocation5 + $0x130] sm:$0xff]
        %v389 = vld [vmem:[#allocation5 + $0x138] sm:$0xff]
        %v390 = vld [vmem:[#allocation5 + $0x140] sm:$0xff]
        %v391 = vld [vmem:[#allocation5 + $0x148] sm:$0xff]
        %v392 = vld [vmem:[#allocation5 + $0x150] sm:$0xff]
        %v393 = vld [vmem:[#allocation5 + $0x158] sm:$0xff]
        %v394 = vld [vmem:[#allocation5 + $0x160] sm:$0xff]
        %v395 = vld [vmem:[#allocation5 + $0x168] sm:$0xff]
        %v396 = vld [vmem:[#allocation5 + $0x170] sm:$0xff]
        %v397 = vld [vmem:[#allocation5 + $0x178] sm:$0xff]
        %v398 = vld [vmem:[%s276] sm:$0x3]
        %v400 = vlaneseq
        %v401 = vshrl.u32 %v400, 7
        %v402 = vsub.s32 0, %v401
        %v403 = vrot.slane %v398, %v402
        %v404 = vlaneseq
        %v405 = vshrl.u32 %v404, 7
        %v406 = vsub.s32 1, %v405
        %v407 = vrot.slane %v398, %v406
        %v474 = vunpack.c.l.b16 %v286
        %v475 = vunpack.c.h.b16 %v286
        %v476 = vunpack.c.l.b16 %v287
        %v477 = vunpack.c.l.b16 %v288
        %v478 = vunpack.c.h.b16 %v288
        %v479 = vunpack.c.l.b16 %v289
        %v480 = vunpack.c.l.b16 %v290
        %v481 = vunpack.c.h.b16 %v290
        %v482 = vunpack.c.l.b16 %v291
        %v483 = vunpack.c.l.b16 %v292
        %v484 = vunpack.c.h.b16 %v292
        %v485 = vunpack.c.l.b16 %v293
        %v486 = vunpack.c.l.b16 %v294
        %v487 = vunpack.c.h.b16 %v294
        %v488 = vunpack.c.l.b16 %v295
        %v489 = vunpack.c.l.b16 %v296
        %v490 = vunpack.c.h.b16 %v296
        %v491 = vunpack.c.l.b16 %v297
        %v492 = vunpack.c.l.b16 %v298
        %v493 = vunpack.c.h.b16 %v298
        %v494 = vunpack.c.l.b16 %v299
        %v495 = vunpack.c.l.b16 %v300
        %v496 = vunpack.c.h.b16 %v300
        %v497 = vunpack.c.l.b16 %v301
        %v498 = vunpack.c.l.b16 %v302
        %v499 = vunpack.c.h.b16 %v302
        %v500 = vunpack.c.l.b16 %v303
        %v501 = vunpack.c.l.b16 %v304
        %v502 = vunpack.c.h.b16 %v304
        %v503 = vunpack.c.l.b16 %v305
        %v504 = vunpack.c.l.b16 %v306
        %v505 = vunpack.c.h.b16 %v306
        %v506 = vunpack.c.l.b16 %v307
        %v507 = vunpack.c.l.b16 %v308
        %v508 = vunpack.c.h.b16 %v308
        %v509 = vunpack.c.l.b16 %v309
        %v510 = vunpack.c.l.b16 %v310
        %v511 = vunpack.c.h.b16 %v310
        %v512 = vunpack.c.l.b16 %v311
        %v513 = vunpack.c.l.b16 %v312
        %v514 = vunpack.c.h.b16 %v312
        %v515 = vunpack.c.l.b16 %v313
        %v516 = vunpack.c.l.b16 %v314
        %v517 = vunpack.c.h.b16 %v314
        %v518 = vunpack.c.l.b16 %v315
        %v519 = vunpack.c.l.b16 %v316
        %v520 = vunpack.c.h.b16 %v316
        %v521 = vunpack.c.l.b16 %v317
        %v522 = vunpack.c.l.b16 %v318
        %v523 = vunpack.c.h.b16 %v318
        %v524 = vunpack.c.l.b16 %v319
        %v525 = vunpack.c.l.b16 %v320
        %v526 = vunpack.c.h.b16 %v320
        %v527 = vunpack.c.l.b16 %v321
        %v528 = vunpack.c.l.b16 %v322
        %v529 = vunpack.c.h.b16 %v322
        %v530 = vunpack.c.l.b16 %v323
        %v531 = vunpack.c.l.b16 %v324
        %v532 = vunpack.c.h.b16 %v324
        %v533 = vunpack.c.l.b16 %v325
        %v534 = vunpack.c.l.b16 %v326
        %v535 = vunpack.c.h.b16 %v326
        %v536 = vunpack.c.l.b16 %v327
        %v537 = vunpack.c.l.b16 %v328
        %v538 = vunpack.c.h.b16 %v328
        %v539 = vunpack.c.l.b16 %v329
        %v540 = vunpack.c.l.b16 %v330
        %v541 = vunpack.c.h.b16 %v330
        %v542 = vunpack.c.l.b16 %v331
        %v543 = vunpack.c.l.b16 %v332
        %v544 = vunpack.c.h.b16 %v332
        %v545 = vunpack.c.l.b16 %v333
        %v546 = vunpack.c.l.b16 %v334
        %v547 = vunpack.c.h.b16 %v334
        %v548 = vunpack.c.l.b16 %v335
        %v549 = vunpack.c.l.b16 %v336
        %v550 = vunpack.c.h.b16 %v336
        %v551 = vunpack.c.l.b16 %v337
        %v552 = vunpack.c.l.b16 %v338
        %v553 = vunpack.c.h.b16 %v338
        %v554 = vunpack.c.l.b16 %v339
        %v555 = vunpack.c.l.b16 %v340
        %v556 = vunpack.c.h.b16 %v340
        %v557 = vunpack.c.l.b16 %v341
        %v558 = vunpack.c.l.b16 %v342
        %v559 = vunpack.c.h.b16 %v342
        %v560 = vunpack.c.l.b16 %v343
        %v561 = vunpack.c.l.b16 %v344
        %v562 = vunpack.c.h.b16 %v344
        %v563 = vunpack.c.l.b16 %v345
        %v564 = vunpack.c.l.b16 %v346
        %v565 = vunpack.c.h.b16 %v346
        %v566 = vunpack.c.l.b16 %v347
        %v567 = vunpack.c.l.b16 %v348
        %v568 = vunpack.c.h.b16 %v348
        %v569 = vunpack.c.l.b16 %v349
        %v570 = vpack.c.b16 %v477, %v474
        %v571 = vpack.c.b16 %v478, %v475
        %v572 = vpack.c.b16 %v479, %v476
        %v573 = vpack.c.b16 %v483, %v480
        %v574 = vpack.c.b16 %v484, %v481
        %v575 = vpack.c.b16 %v485, %v482
        %v576 = vpack.c.b16 %v489, %v486
        %v577 = vpack.c.b16 %v490, %v487
        %v578 = vpack.c.b16 %v491, %v488
        %v579 = vpack.c.b16 %v495, %v492
        %v580 = vpack.c.b16 %v496, %v493
        %v581 = vpack.c.b16 %v497, %v494
        %v582 = vpack.c.b16 %v501, %v498
        %v583 = vpack.c.b16 %v502, %v499
        %v584 = vpack.c.b16 %v503, %v500
        %v585 = vpack.c.b16 %v507, %v504
        %v586 = vpack.c.b16 %v508, %v505
        %v587 = vpack.c.b16 %v509, %v506
        %v588 = vpack.c.b16 %v513, %v510
        %v589 = vpack.c.b16 %v514, %v511
        %v590 = vpack.c.b16 %v515, %v512
        %v591 = vpack.c.b16 %v519, %v516
        %v592 = vpack.c.b16 %v520, %v517
        %v593 = vpack.c.b16 %v521, %v518
        %v594 = vpack.c.b16 %v525, %v522
        %v595 = vpack.c.b16 %v526, %v523
        %v596 = vpack.c.b16 %v527, %v524
        %v597 = vpack.c.b16 %v531, %v528
        %v598 = vpack.c.b16 %v532, %v529
        %v599 = vpack.c.b16 %v533, %v530
        %v600 = vpack.c.b16 %v537, %v534
        %v601 = vpack.c.b16 %v538, %v535
        %v602 = vpack.c.b16 %v539, %v536
        %v603 = vpack.c.b16 %v543, %v540
        %v604 = vpack.c.b16 %v544, %v541
        %v605 = vpack.c.b16 %v545, %v542
        %v606 = vpack.c.b16 %v549, %v546
        %v607 = vpack.c.b16 %v550, %v547
        %v608 = vpack.c.b16 %v551, %v548
        %v609 = vpack.c.b16 %v555, %v552
        %v610 = vpack.c.b16 %v556, %v553
        %v611 = vpack.c.b16 %v557, %v554
        %v612 = vpack.c.b16 %v561, %v558
        %v613 = vpack.c.b16 %v562, %v559
        %v614 = vpack.c.b16 %v563, %v560
        %v615 = vpack.c.b16 %v567, %v564
        %v616 = vpack.c.b16 %v568, %v565
        %v617 = vpack.c.b16 %v569, %v566
        %v714 = vunpack.c.l.b16 %v350
        %v715 = vunpack.c.h.b16 %v350
        %v716 = vunpack.c.l.b16 %v351
        %v717 = vunpack.c.h.b16 %v351
        %v718 = vunpack.c.l.b16 %v352
        %v719 = vunpack.c.h.b16 %v352
        %v720 = vunpack.c.l.b16 %v353
        %v721 = vunpack.c.h.b16 %v353
        %v722 = vunpack.c.l.b16 %v354
        %v723 = vunpack.c.h.b16 %v354
        %v724 = vunpack.c.l.b16 %v355
        %v725 = vunpack.c.h.b16 %v355
        %v726 = vunpack.c.l.b16 %v356
        %v727 = vunpack.c.h.b16 %v356
        %v728 = vunpack.c.l.b16 %v357
        %v729 = vunpack.c.h.b16 %v357
        %v730 = vunpack.c.l.b16 %v358
        %v731 = vunpack.c.h.b16 %v358
        %v732 = vunpack.c.l.b16 %v359
        %v733 = vunpack.c.h.b16 %v359
        %v734 = vunpack.c.l.b16 %v360
        %v735 = vunpack.c.h.b16 %v360
        %v736 = vunpack.c.l.b16 %v361
        %v737 = vunpack.c.h.b16 %v361
        %v738 = vunpack.c.l.b16 %v362
        %v739 = vunpack.c.h.b16 %v362
        %v740 = vunpack.c.l.b16 %v363
        %v741 = vunpack.c.h.b16 %v363
        %v742 = vunpack.c.l.b16 %v364
        %v743 = vunpack.c.h.b16 %v364
        %v744 = vunpack.c.l.b16 %v365
        %v745 = vunpack.c.h.b16 %v365
        %v746 = vunpack.c.l.b16 %v366
        %v747 = vunpack.c.h.b16 %v366
        %v748 = vunpack.c.l.b16 %v367
        %v749 = vunpack.c.h.b16 %v367
        %v750 = vunpack.c.l.b16 %v368
        %v751 = vunpack.c.h.b16 %v368
        %v752 = vunpack.c.l.b16 %v369
        %v753 = vunpack.c.h.b16 %v369
        %v754 = vunpack.c.l.b16 %v370
        %v755 = vunpack.c.h.b16 %v370
        %v756 = vunpack.c.l.b16 %v371
        %v757 = vunpack.c.h.b16 %v371
        %v758 = vunpack.c.l.b16 %v372
        %v759 = vunpack.c.h.b16 %v372
        %v760 = vunpack.c.l.b16 %v373
        %v761 = vunpack.c.h.b16 %v373
        %v762 = vunpack.c.l.b16 %v374
        %v763 = vunpack.c.h.b16 %v374
        %v764 = vunpack.c.l.b16 %v375
        %v765 = vunpack.c.h.b16 %v375
        %v766 = vunpack.c.l.b16 %v376
        %v767 = vunpack.c.h.b16 %v376
        %v768 = vunpack.c.l.b16 %v377
        %v769 = vunpack.c.h.b16 %v377
        %v770 = vunpack.c.l.b16 %v378
        %v771 = vunpack.c.h.b16 %v378
        %v772 = vunpack.c.l.b16 %v379
        %v773 = vunpack.c.h.b16 %v379
        %v774 = vunpack.c.l.b16 %v380
        %v775 = vunpack.c.h.b16 %v380
        %v776 = vunpack.c.l.b16 %v381
        %v777 = vunpack.c.h.b16 %v381
        %v778 = vunpack.c.l.b16 %v382
        %v779 = vunpack.c.h.b16 %v382
        %v780 = vunpack.c.l.b16 %v383
        %v781 = vunpack.c.h.b16 %v383
        %v782 = vunpack.c.l.b16 %v384
        %v783 = vunpack.c.h.b16 %v384
        %v784 = vunpack.c.l.b16 %v385
        %v785 = vunpack.c.h.b16 %v385
        %v786 = vunpack.c.l.b16 %v386
        %v787 = vunpack.c.h.b16 %v386
        %v788 = vunpack.c.l.b16 %v387
        %v789 = vunpack.c.h.b16 %v387
        %v790 = vunpack.c.l.b16 %v388
        %v791 = vunpack.c.h.b16 %v388
        %v792 = vunpack.c.l.b16 %v389
        %v793 = vunpack.c.h.b16 %v389
        %v794 = vunpack.c.l.b16 %v390
        %v795 = vunpack.c.h.b16 %v390
        %v796 = vunpack.c.l.b16 %v391
        %v797 = vunpack.c.h.b16 %v391
        %v798 = vunpack.c.l.b16 %v392
        %v799 = vunpack.c.h.b16 %v392
        %v800 = vunpack.c.l.b16 %v393
        %v801 = vunpack.c.h.b16 %v393
        %v802 = vunpack.c.l.b16 %v394
        %v803 = vunpack.c.h.b16 %v394
        %v804 = vunpack.c.l.b16 %v395
        %v805 = vunpack.c.h.b16 %v395
        %v806 = vunpack.c.l.b16 %v396
        %v807 = vunpack.c.h.b16 %v396
        %v808 = vunpack.c.l.b16 %v397
        %v809 = vunpack.c.h.b16 %v397
        %v810 = vpack.c.b16 %v716, %v714
        %v811 = vpack.c.b16 %v717, %v715
        %v812 = vpack.c.b16 %v720, %v718
        %v813 = vpack.c.b16 %v721, %v719
        %v814 = vpack.c.b16 %v724, %v722
        %v815 = vpack.c.b16 %v725, %v723
        %v816 = vpack.c.b16 %v728, %v726
        %v817 = vpack.c.b16 %v729, %v727
        %v818 = vpack.c.b16 %v732, %v730
        %v819 = vpack.c.b16 %v733, %v731
        %v820 = vpack.c.b16 %v736, %v734
        %v821 = vpack.c.b16 %v737, %v735
        %v822 = vpack.c.b16 %v740, %v738
        %v823 = vpack.c.b16 %v741, %v739
        %v824 = vpack.c.b16 %v744, %v742
        %v825 = vpack.c.b16 %v745, %v743
        %v826 = vpack.c.b16 %v748, %v746
        %v827 = vpack.c.b16 %v749, %v747
        %v828 = vpack.c.b16 %v752, %v750
        %v829 = vpack.c.b16 %v753, %v751
        %v830 = vpack.c.b16 %v756, %v754
        %v831 = vpack.c.b16 %v757, %v755
        %v832 = vpack.c.b16 %v760, %v758
        %v833 = vpack.c.b16 %v761, %v759
        %v834 = vpack.c.b16 %v764, %v762
        %v835 = vpack.c.b16 %v765, %v763
        %v836 = vpack.c.b16 %v768, %v766
        %v837 = vpack.c.b16 %v769, %v767
        %v838 = vpack.c.b16 %v772, %v770
        %v839 = vpack.c.b16 %v773, %v771
        %v840 = vpack.c.b16 %v776, %v774
        %v841 = vpack.c.b16 %v777, %v775
        %v842 = vpack.c.b16 %v780, %v778
        %v843 = vpack.c.b16 %v781, %v779
        %v844 = vpack.c.b16 %v784, %v782
        %v845 = vpack.c.b16 %v785, %v783
        %v846 = vpack.c.b16 %v788, %v786
        %v847 = vpack.c.b16 %v789, %v787
        %v848 = vpack.c.b16 %v792, %v790
        %v849 = vpack.c.b16 %v793, %v791
        %v850 = vpack.c.b16 %v796, %v794
        %v851 = vpack.c.b16 %v797, %v795
        %v852 = vpack.c.b16 %v800, %v798
        %v853 = vpack.c.b16 %v801, %v799
        %v854 = vpack.c.b16 %v804, %v802
        %v855 = vpack.c.b16 %v805, %v803
        %v856 = vpack.c.b16 %v808, %v806
        %v857 = vpack.c.b16 %v809, %v807
        %906 = vmatprep.subr.bf16.mxu0 %v811
        %907 = vmatpush1.bf16.msra.mxu0 %v810
        %908 = vmatprep.subr.bf16.mxu0 %v813
        %909 = vmatpush1.bf16.msra.mxu0 %v812
        %910 = vmatprep.subr.bf16.mxu0 %v815
        %911 = vmatpush1.bf16.msra.mxu0 %v814
        %912 = vmatprep.subr.bf16.mxu0 %v817
        %913 = vmatpush1.bf16.msra.mxu0 %v816
        %914 = vmatprep.subr.bf16.mxu0 %v819
        %915 = vmatpush1.bf16.msra.mxu0 %v818
        %916 = vmatprep.subr.bf16.mxu0 %v821
        %917 = vmatpush1.bf16.msra.mxu0 %v820
        %918 = vmatprep.subr.bf16.mxu0 %v823
        %919 = vmatpush1.bf16.msra.mxu0 %v822
        %920 = vmatprep.subr.bf16.mxu0 %v825
        %921 = vmatpush1.bf16.msra.mxu0 %v824
        %922 = vmatprep.subr.bf16.mxu0 %v827
        %923 = vmatpush1.bf16.msra.mxu0 %v826
        %924 = vmatprep.subr.bf16.mxu0 %v829
        %925 = vmatpush1.bf16.msra.mxu0 %v828
        %926 = vmatprep.subr.bf16.mxu0 %v831
        %927 = vmatpush1.bf16.msra.mxu0 %v830
        %928 = vmatprep.subr.bf16.mxu0 %v833
        %929 = vmatpush1.bf16.msra.mxu0 %v832
        %930 = vmatprep.subr.bf16.mxu0 %v835
        %931 = vmatpush1.bf16.msra.mxu0 %v834
        %932 = vmatprep.subr.bf16.mxu0 %v837
        %933 = vmatpush1.bf16.msra.mxu0 %v836
        %934 = vmatprep.subr.bf16.mxu0 %v839
        %935 = vmatpush1.bf16.msra.mxu0 %v838
        %936 = vmatprep.subr.bf16.mxu0 %v841
        %937 = vmatpush1.bf16.msra.mxu0 %v840
        %938 = vmatprep.mubr.bf16.mxu0 %v571
        %939 = vmatmul.mubr.bf16.gmra.mrb[0].mxu0 %v570
        %v940 = vpop.f32.mrb[0].mxu0
        %v941 = vadd.f32 %v403, %v940
        %v942 = vpop.f32.mrb[0].mxu0
        %v943 = vadd.f32 %v407, %v942
        %v944 = vpop.f32.mrb[0].mxu0
        %v945 = vadd.f32 %v403, %v944
        %v946 = vpop.f32.mrb[0].mxu0
        %v947 = vadd.f32 %v407, %v946
        %948 = vmatprep.mubr.bf16.mxu0 %v574
        %949 = vmatmul.mubr.bf16.gmra.mrb[0].mxu0 %v573
        %v950 = vpop.f32.mrb[0].mxu0
        %v951 = vadd.f32 %v403, %v950
        %v952 = vpop.f32.mrb[0].mxu0
        %v953 = vadd.f32 %v407, %v952
        %v954 = vpop.f32.mrb[0].mxu0
        %v955 = vadd.f32 %v403, %v954
        %v956 = vpop.f32.mrb[0].mxu0
        %v957 = vadd.f32 %v407, %v956
        %958 = vmatprep.mubr.bf16.mxu0 %v577
        %959 = vmatmul.mubr.bf16.gmra.mrb[0].mxu0 %v576
        %v960 = vpop.f32.mrb[0].mxu0
        %v961 = vadd.f32 %v403, %v960
        %v962 = vpop.f32.mrb[0].mxu0
        %v963 = vadd.f32 %v407, %v962
        %v964 = vpop.f32.mrb[0].mxu0
        %v965 = vadd.f32 %v403, %v964
        %v966 = vpop.f32.mrb[0].mxu0
        %v967 = vadd.f32 %v407, %v966
        %968 = vmatprep.mubr.bf16.mxu0 %v580
        %969 = vmatmul.mubr.bf16.gmra.mrb[0].mxu0 %v579
        %v970 = vpop.f32.mrb[0].mxu0
        %v971 = vadd.f32 %v403, %v970
        %v972 = vpop.f32.mrb[0].mxu0
        %v973 = vadd.f32 %v407, %v972
        %v974 = vpop.f32.mrb[0].mxu0
        %v975 = vadd.f32 %v403, %v974
        %v976 = vpop.f32.mrb[0].mxu0
        %v977 = vadd.f32 %v407, %v976
        %978 = vmatprep.mubr.bf16.mxu0 %v583
        %979 = vmatmul.mubr.bf16.gmra.mrb[0].mxu0 %v582
        %v980 = vpop.f32.mrb[0].mxu0
        %v981 = vadd.f32 %v403, %v980
        %v982 = vpop.f32.mrb[0].mxu0
        %v983 = vadd.f32 %v407, %v982
        %v984 = vpop.f32.mrb[0].mxu0
        %v985 = vadd.f32 %v403, %v984
        %v986 = vpop.f32.mrb[0].mxu0
        %v987 = vadd.f32 %v407, %v986
        %988 = vmatprep.mubr.bf16.mxu0 %v586
        %989 = vmatmul.mubr.bf16.gmra.mrb[0].mxu0 %v585
        %v990 = vpop.f32.mrb[0].mxu0
        %v991 = vadd.f32 %v403, %v990
        %v992 = vpop.f32.mrb[0].mxu0
        %v993 = vadd.f32 %v407, %v992
        %v994 = vpop.f32.mrb[0].mxu0
        %v995 = vadd.f32 %v403, %v994
        %v996 = vpop.f32.mrb[0].mxu0
        %v997 = vadd.f32 %v407, %v996
        %998 = vmatprep.mubr.bf16.mxu0 %v589
        %999 = vmatmul.mubr.bf16.gmra.mrb[0].mxu0 %v588
        %v1000 = vpop.f32.mrb[0].mxu0
        %v1001 = vadd.f32 %v403, %v1000
        %v1002 = vpop.f32.mrb[0].mxu0
        %v1003 = vadd.f32 %v407, %v1002
        %v1004 = vpop.f32.mrb[0].mxu0
        %v1005 = vadd.f32 %v403, %v1004
        %v1006 = vpop.f32.mrb[0].mxu0
        %v1007 = vadd.f32 %v407, %v1006
        %1008 = vmatprep.mubr.bf16.mxu0 %v592
        %1009 = vmatmul.mubr.bf16.gmra.mrb[0].mxu0 %v591
        %v1010 = vpop.f32.mrb[0].mxu0
        %v1011 = vadd.f32 %v403, %v1010
        %v1012 = vpop.f32.mrb[0].mxu0
        %v1013 = vadd.f32 %v407, %v1012
        %v1014 = vpop.f32.mrb[0].mxu0
        %v1015 = vadd.f32 %v403, %v1014
        %v1016 = vpop.f32.mrb[0].mxu0
        %v1017 = vadd.f32 %v407, %v1016
        %1018 = vmatprep.mubr.bf16.mxu0 %v595
        %1019 = vmatmul.mubr.bf16.gmra.mrb[0].mxu0 %v594
        %v1020 = vpop.f32.mrb[0].mxu0
        %v1021 = vadd.f32 %v403, %v1020
        %v1022 = vpop.f32.mrb[0].mxu0
        %v1023 = vadd.f32 %v407, %v1022
        %v1024 = vpop.f32.mrb[0].mxu0
        %v1025 = vadd.f32 %v403, %v1024
        %v1026 = vpop.f32.mrb[0].mxu0
        %v1027 = vadd.f32 %v407, %v1026
        %1028 = vmatprep.mubr.bf16.mxu0 %v598
        %1029 = vmatmul.mubr.bf16.gmra.mrb[0].mxu0 %v597
        %v1030 = vpop.f32.mrb[0].mxu0
        %v1031 = vadd.f32 %v403, %v1030
        %v1032 = vpop.f32.mrb[0].mxu0
        %v1033 = vadd.f32 %v407, %v1032
        %v1034 = vpop.f32.mrb[0].mxu0
        %v1035 = vadd.f32 %v403, %v1034
        %v1036 = vpop.f32.mrb[0].mxu0
        %v1037 = vadd.f32 %v407, %v1036
        %1038 = vmatprep.mubr.bf16.mxu0 %v601
        %1039 = vmatmul.mubr.bf16.gmra.mrb[0].mxu0 %v600
        %v1040 = vpop.f32.mrb[0].mxu0
        %v1041 = vadd.f32 %v403, %v1040
        %v1042 = vpop.f32.mrb[0].mxu0
        %v1043 = vadd.f32 %v407, %v1042
        %v1044 = vpop.f32.mrb[0].mxu0
        %v1045 = vadd.f32 %v403, %v1044
        %v1046 = vpop.f32.mrb[0].mxu0
        %v1047 = vadd.f32 %v407, %v1046
        %1048 = vmatprep.mubr.bf16.mxu0 %v604
        %1049 = vmatmul.mubr.bf16.gmra.mrb[0].mxu0 %v603
        %v1050 = vpop.f32.mrb[0].mxu0
        %v1051 = vadd.f32 %v403, %v1050
        %v1052 = vpop.f32.mrb[0].mxu0
        %v1053 = vadd.f32 %v407, %v1052
        %v1054 = vpop.f32.mrb[0].mxu0
        %v1055 = vadd.f32 %v403, %v1054
        %v1056 = vpop.f32.mrb[0].mxu0
        %v1057 = vadd.f32 %v407, %v1056
        %1058 = vmatprep.mubr.bf16.mxu0 %v607
        %1059 = vmatmul.mubr.bf16.gmra.mrb[0].mxu0 %v606
        %v1060 = vpop.f32.mrb[0].mxu0
        %v1061 = vadd.f32 %v403, %v1060
        %v1062 = vpop.f32.mrb[0].mxu0
        %v1063 = vadd.f32 %v407, %v1062
        %v1064 = vpop.f32.mrb[0].mxu0
        %v1065 = vadd.f32 %v403, %v1064
        %v1066 = vpop.f32.mrb[0].mxu0
        %v1067 = vadd.f32 %v407, %v1066
        %1068 = vmatprep.mubr.bf16.mxu0 %v610
        %1069 = vmatmul.mubr.bf16.gmra.mrb[0].mxu0 %v609
        %v1070 = vpop.f32.mrb[0].mxu0
        %v1071 = vadd.f32 %v403, %v1070
        %v1072 = vpop.f32.mrb[0].mxu0
        %v1073 = vadd.f32 %v407, %v1072
        %v1074 = vpop.f32.mrb[0].mxu0
        %v1075 = vadd.f32 %v403, %v1074
        %v1076 = vpop.f32.mrb[0].mxu0
        %v1077 = vadd.f32 %v407, %v1076
        %1078 = vmatprep.mubr.bf16.mxu0 %v613
        %1079 = vmatmul.mubr.bf16.gmra.mrb[0].mxu0 %v612
        %v1080 = vpop.f32.mrb[0].mxu0
        %v1081 = vadd.f32 %v403, %v1080
        %v1082 = vpop.f32.mrb[0].mxu0
        %v1083 = vadd.f32 %v407, %v1082
        %v1084 = vpop.f32.mrb[0].mxu0
        %v1085 = vadd.f32 %v403, %v1084
        %v1086 = vpop.f32.mrb[0].mxu0
        %v1087 = vadd.f32 %v407, %v1086
        %1088 = vmatprep.mubr.bf16.mxu0 %v616
        %1089 = vmatmul.mubr.bf16.gmra.mrb[0].mxu0 %v615
        %v1090 = vpop.f32.mrb[0].mxu0
        %v1091 = vadd.f32 %v403, %v1090
        %v1092 = vpop.f32.mrb[0].mxu0
        %v1093 = vadd.f32 %v407, %v1092
        %v1094 = vpop.f32.mrb[0].mxu0
        %v1095 = vadd.f32 %v403, %v1094
        %v1096 = vpop.f32.mrb[0].mxu0
        %v1097 = vadd.f32 %v407, %v1096
        %1098 = vdwg.mxu0
        %1099 = vmatprep.subr.bf16.mxu0 %v843
        %1100 = vmatpush1.bf16.msra.mxu0 %v842
        %1101 = vmatprep.subr.bf16.mxu0 %v845
        %1102 = vmatpush1.bf16.msra.mxu0 %v844
        %1103 = vmatprep.subr.bf16.mxu0 %v847
        %1104 = vmatpush1.bf16.msra.mxu0 %v846
        %1105 = vmatprep.subr.bf16.mxu0 %v849
        %1106 = vmatpush1.bf16.msra.mxu0 %v848
        %1107 = vmatprep.subr.bf16.mxu0 %v851
        %1108 = vmatpush1.bf16.msra.mxu0 %v850
        %1109 = vmatprep.subr.bf16.mxu0 %v853
        %1110 = vmatpush1.bf16.msra.mxu0 %v852
        %1111 = vmatprep.subr.bf16.mxu0 %v855
        %1112 = vmatpush1.bf16.msra.mxu0 %v854
        %1113 = vmatprep.subr.bf16.mxu0 %v857
        %1114 = vmatpush1.bf16.msra.mxu0 %v856
        %1115 = vmatprep.subr.bf16.mxu0 0
        %1116 = vmatpush1.bf16.msra.mxu0 0
        %1117 = vmatprep.subr.bf16.mxu0 0
        %1118 = vmatpush1.bf16.msra.mxu0 0
        %1119 = vmatprep.subr.bf16.mxu0 0
        %1120 = vmatpush1.bf16.msra.mxu0 0
        %1121 = vmatprep.subr.bf16.mxu0 0
        %1122 = vmatpush1.bf16.msra.mxu0 0
        %1123 = vmatprep.subr.bf16.mxu0 0
        %1124 = vmatpush1.bf16.msra.mxu0 0
        %1125 = vmatprep.subr.bf16.mxu0 0
        %1126 = vmatpush1.bf16.msra.mxu0 0
        %1127 = vmatprep.subr.bf16.mxu0 0
        %1128 = vmatpush1.bf16.msra.mxu0 0
        %1129 = vmatprep.subr.bf16.mxu0 0
        %1130 = vmatpush1.bf16.msra.mxu0 0
        %1131 = vmatprep.mubr.bf16.mxu0 0
        %1132 = vmatmul.mubr.bf16.gmra.mrb[0].mxu0 %v572
        %v1133 = vpop.f32.mrb[0].mxu0
        %v1134 = vadd.f32 %v941, %v1133
        %v1135 = vpop.f32.mrb[0].mxu0
        %v1136 = vadd.f32 %v943, %v1135
        %v1137 = vpop.f32.mrb[0].mxu0
        %v1138 = vadd.f32 %v945, %v1137
        %v1139 = vpop.f32.mrb[0].mxu0
        %v1140 = vadd.f32 %v947, %v1139
        %1141 = vmatprep.mubr.bf16.mxu0 0
        %1142 = vmatmul.mubr.bf16.gmra.mrb[0].mxu0 %v575
        %v1143 = vpop.f32.mrb[0].mxu0
        %v1144 = vadd.f32 %v951, %v1143
        %v1145 = vpop.f32.mrb[0].mxu0
        %v1146 = vadd.f32 %v953, %v1145
        %v1147 = vpop.f32.mrb[0].mxu0
        %v1148 = vadd.f32 %v955, %v1147
        %v1149 = vpop.f32.mrb[0].mxu0
        %v1150 = vadd.f32 %v957, %v1149
        %1151 = vmatprep.mubr.bf16.mxu0 0
        %1152 = vmatmul.mubr.bf16.gmra.mrb[0].mxu0 %v578
        %v1153 = vpop.f32.mrb[0].mxu0
        %v1154 = vadd.f32 %v961, %v1153
        %v1155 = vpop.f32.mrb[0].mxu0
        %v1156 = vadd.f32 %v963, %v1155
        %v1157 = vpop.f32.mrb[0].mxu0
        %v1158 = vadd.f32 %v965, %v1157
        %v1159 = vpop.f32.mrb[0].mxu0
        %v1160 = vadd.f32 %v967, %v1159
        %1161 = vmatprep.mubr.bf16.mxu0 0
        %1162 = vmatmul.mubr.bf16.gmra.mrb[0].mxu0 %v581
        %v1163 = vpop.f32.mrb[0].mxu0
        %v1164 = vadd.f32 %v971, %v1163
        %v1165 = vpop.f32.mrb[0].mxu0
        %v1166 = vadd.f32 %v973, %v1165
        %v1167 = vpop.f32.mrb[0].mxu0
        %v1168 = vadd.f32 %v975, %v1167
        %v1169 = vpop.f32.mrb[0].mxu0
        %v1170 = vadd.f32 %v977, %v1169
        %1171 = vmatprep.mubr.bf16.mxu0 0
        %1172 = vmatmul.mubr.bf16.gmra.mrb[0].mxu0 %v584
        %v1173 = vpop.f32.mrb[0].mxu0
        %v1174 = vadd.f32 %v981, %v1173
        %v1175 = vpop.f32.mrb[0].mxu0
        %v1176 = vadd.f32 %v983, %v1175
        %v1177 = vpop.f32.mrb[0].mxu0
        %v1178 = vadd.f32 %v985, %v1177
        %v1179 = vpop.f32.mrb[0].mxu0
        %v1180 = vadd.f32 %v987, %v1179
        %1181 = vmatprep.mubr.bf16.mxu0 0
        %1182 = vmatmul.mubr.bf16.gmra.mrb[0].mxu0 %v587
        %v1183 = vpop.f32.mrb[0].mxu0
        %v1184 = vadd.f32 %v991, %v1183
        %v1185 = vpop.f32.mrb[0].mxu0
        %v1186 = vadd.f32 %v993, %v1185
        %v1187 = vpop.f32.mrb[0].mxu0
        %v1188 = vadd.f32 %v995, %v1187
        %v1189 = vpop.f32.mrb[0].mxu0
        %v1190 = vadd.f32 %v997, %v1189
        %1191 = vmatprep.mubr.bf16.mxu0 0
        %1192 = vmatmul.mubr.bf16.gmra.mrb[0].mxu0 %v590
        %v1193 = vpop.f32.mrb[0].mxu0
        %v1194 = vadd.f32 %v1001, %v1193
        %v1195 = vpop.f32.mrb[0].mxu0
        %v1196 = vadd.f32 %v1003, %v1195
        %v1197 = vpop.f32.mrb[0].mxu0
        %v1198 = vadd.f32 %v1005, %v1197
        %v1199 = vpop.f32.mrb[0].mxu0
        %v1200 = vadd.f32 %v1007, %v1199
        %1201 = vmatprep.mubr.bf16.mxu0 0
        %1202 = vmatmul.mubr.bf16.gmra.mrb[0].mxu0 %v593
        %v1203 = vpop.f32.mrb[0].mxu0
        %v1204 = vadd.f32 %v1011, %v1203
        %v1205 = vpop.f32.mrb[0].mxu0
        %v1206 = vadd.f32 %v1013, %v1205
        %v1207 = vpop.f32.mrb[0].mxu0
        %v1208 = vadd.f32 %v1015, %v1207
        %v1209 = vpop.f32.mrb[0].mxu0
        %v1210 = vadd.f32 %v1017, %v1209
        %1211 = vmatprep.mubr.bf16.mxu0 0
        %1212 = vmatmul.mubr.bf16.gmra.mrb[0].mxu0 %v596
        %v1213 = vpop.f32.mrb[0].mxu0
        %v1214 = vadd.f32 %v1021, %v1213
        %v1215 = vpop.f32.mrb[0].mxu0
        %v1216 = vadd.f32 %v1023, %v1215
        %v1217 = vpop.f32.mrb[0].mxu0
        %v1218 = vadd.f32 %v1025, %v1217
        %v1219 = vpop.f32.mrb[0].mxu0
        %v1220 = vadd.f32 %v1027, %v1219
        %1221 = vmatprep.mubr.bf16.mxu0 0
        %1222 = vmatmul.mubr.bf16.gmra.mrb[0].mxu0 %v599
        %v1223 = vpop.f32.mrb[0].mxu0
        %v1224 = vadd.f32 %v1031, %v1223
        %v1225 = vpop.f32.mrb[0].mxu0
        %v1226 = vadd.f32 %v1033, %v1225
        %v1227 = vpop.f32.mrb[0].mxu0
        %v1228 = vadd.f32 %v1035, %v1227
        %v1229 = vpop.f32.mrb[0].mxu0
        %v1230 = vadd.f32 %v1037, %v1229
        %1231 = vmatprep.mubr.bf16.mxu0 0
        %1232 = vmatmul.mubr.bf16.gmra.mrb[0].mxu0 %v602
        %v1233 = vpop.f32.mrb[0].mxu0
        %v1234 = vadd.f32 %v1041, %v1233
        %v1235 = vpop.f32.mrb[0].mxu0
        %v1236 = vadd.f32 %v1043, %v1235
        %v1237 = vpop.f32.mrb[0].mxu0
        %v1238 = vadd.f32 %v1045, %v1237
        %v1239 = vpop.f32.mrb[0].mxu0
        %v1240 = vadd.f32 %v1047, %v1239
        %1241 = vmatprep.mubr.bf16.mxu0 0
        %1242 = vmatmul.mubr.bf16.gmra.mrb[0].mxu0 %v605
        %v1243 = vpop.f32.mrb[0].mxu0
        %v1244 = vadd.f32 %v1051, %v1243
        %v1245 = vpop.f32.mrb[0].mxu0
        %v1246 = vadd.f32 %v1053, %v1245
        %v1247 = vpop.f32.mrb[0].mxu0
        %v1248 = vadd.f32 %v1055, %v1247
        %v1249 = vpop.f32.mrb[0].mxu0
        %v1250 = vadd.f32 %v1057, %v1249
        %1251 = vmatprep.mubr.bf16.mxu0 0
        %1252 = vmatmul.mubr.bf16.gmra.mrb[0].mxu0 %v608
        %v1253 = vpop.f32.mrb[0].mxu0
        %v1254 = vadd.f32 %v1061, %v1253
        %v1255 = vpop.f32.mrb[0].mxu0
        %v1256 = vadd.f32 %v1063, %v1255
        %v1257 = vpop.f32.mrb[0].mxu0
        %v1258 = vadd.f32 %v1065, %v1257
        %v1259 = vpop.f32.mrb[0].mxu0
        %v1260 = vadd.f32 %v1067, %v1259
        %1261 = vmatprep.mubr.bf16.mxu0 0
        %1262 = vmatmul.mubr.bf16.gmra.mrb[0].mxu0 %v611
        %v1263 = vpop.f32.mrb[0].mxu0
        %v1264 = vadd.f32 %v1071, %v1263
        %v1265 = vpop.f32.mrb[0].mxu0
        %v1266 = vadd.f32 %v1073, %v1265
        %v1267 = vpop.f32.mrb[0].mxu0
        %v1268 = vadd.f32 %v1075, %v1267
        %v1269 = vpop.f32.mrb[0].mxu0
        %v1270 = vadd.f32 %v1077, %v1269
        %1271 = vmatprep.mubr.bf16.mxu0 0
        %1272 = vmatmul.mubr.bf16.gmra.mrb[0].mxu0 %v614
        %v1273 = vpop.f32.mrb[0].mxu0
        %v1274 = vadd.f32 %v1081, %v1273
        %v1275 = vpop.f32.mrb[0].mxu0
        %v1276 = vadd.f32 %v1083, %v1275
        %v1277 = vpop.f32.mrb[0].mxu0
        %v1278 = vadd.f32 %v1085, %v1277
        %v1279 = vpop.f32.mrb[0].mxu0
        %v1280 = vadd.f32 %v1087, %v1279
        %1281 = vmatprep.mubr.bf16.mxu0 0
        %1282 = vmatmul.mubr.bf16.gmra.mrb[0].mxu0 %v617
        %v1283 = vpop.f32.mrb[0].mxu0
        %v1284 = vadd.f32 %v1091, %v1283
        %v1285 = vpop.f32.mrb[0].mxu0
        %v1286 = vadd.f32 %v1093, %v1285
        %v1287 = vpop.f32.mrb[0].mxu0
        %v1288 = vadd.f32 %v1095, %v1287
        %v1289 = vpop.f32.mrb[0].mxu0
        %v1290 = vadd.f32 %v1097, %v1289
        %1291 = vdwg.mxu0
        %vm1292 = vcmp.gt.f32.partialorder %v1134, 20.0
        %vm1293 = vcmp.gt.f32.partialorder %v1136, 20.0
        %vm1294 = vcmp.gt.f32.partialorder %v1138, 20.0
        %vm1295 = vcmp.gt.f32.partialorder %v1140, 20.0
        %vm1296 = vcmp.gt.f32.partialorder %v1144, 20.0
        %vm1297 = vcmp.gt.f32.partialorder %v1146, 20.0
        %vm1298 = vcmp.gt.f32.partialorder %v1148, 20.0
        %vm1299 = vcmp.gt.f32.partialorder %v1150, 20.0
        %vm1300 = vcmp.gt.f32.partialorder %v1154, 20.0
        %vm1301 = vcmp.gt.f32.partialorder %v1156, 20.0
        %vm1302 = vcmp.gt.f32.partialorder %v1158, 20.0
        %vm1303 = vcmp.gt.f32.partialorder %v1160, 20.0
        %vm1304 = vcmp.gt.f32.partialorder %v1164, 20.0
        %vm1305 = vcmp.gt.f32.partialorder %v1166, 20.0
        %vm1306 = vcmp.gt.f32.partialorder %v1168, 20.0
        %vm1307 = vcmp.gt.f32.partialorder %v1170, 20.0
        %vm1308 = vcmp.gt.f32.partialorder %v1174, 20.0
        %vm1309 = vcmp.gt.f32.partialorder %v1176, 20.0
        %vm1310 = vcmp.gt.f32.partialorder %v1178, 20.0
        %vm1311 = vcmp.gt.f32.partialorder %v1180, 20.0
        %vm1312 = vcmp.gt.f32.partialorder %v1184, 20.0
        %vm1313 = vcmp.gt.f32.partialorder %v1186, 20.0
        %vm1314 = vcmp.gt.f32.partialorder %v1188, 20.0
        %vm1315 = vcmp.gt.f32.partialorder %v1190, 20.0
        %vm1316 = vcmp.gt.f32.partialorder %v1194, 20.0
        %vm1317 = vcmp.gt.f32.partialorder %v1196, 20.0
        %vm1318 = vcmp.gt.f32.partialorder %v1198, 20.0
        %vm1319 = vcmp.gt.f32.partialorder %v1200, 20.0
        %vm1320 = vcmp.gt.f32.partialorder %v1204, 20.0
        %vm1321 = vcmp.gt.f32.partialorder %v1206, 20.0
        %vm1322 = vcmp.gt.f32.partialorder %v1208, 20.0
        %vm1323 = vcmp.gt.f32.partialorder %v1210, 20.0
        %vm1324 = vcmp.gt.f32.partialorder %v1214, 20.0
        %vm1325 = vcmp.gt.f32.partialorder %v1216, 20.0
        %vm1326 = vcmp.gt.f32.partialorder %v1218, 20.0
        %vm1327 = vcmp.gt.f32.partialorder %v1220, 20.0
        %vm1328 = vcmp.gt.f32.partialorder %v1224, 20.0
        %vm1329 = vcmp.gt.f32.partialorder %v1226, 20.0
        %vm1330 = vcmp.gt.f32.partialorder %v1228, 20.0
        %vm1331 = vcmp.gt.f32.partialorder %v1230, 20.0
        %vm1332 = vcmp.gt.f32.partialorder %v1234, 20.0
        %vm1333 = vcmp.gt.f32.partialorder %v1236, 20.0
        %vm1334 = vcmp.gt.f32.partialorder %v1238, 20.0
        %vm1335 = vcmp.gt.f32.partialorder %v1240, 20.0
        %vm1336 = vcmp.gt.f32.partialorder %v1244, 20.0
        %vm1337 = vcmp.gt.f32.partialorder %v1246, 20.0
        %vm1338 = vcmp.gt.f32.partialorder %v1248, 20.0
        %vm1339 = vcmp.gt.f32.partialorder %v1250, 20.0
        %vm1340 = vcmp.gt.f32.partialorder %v1254, 20.0
        %vm1341 = vcmp.gt.f32.partialorder %v1256, 20.0
        %vm1342 = vcmp.gt.f32.partialorder %v1258, 20.0
        %vm1343 = vcmp.gt.f32.partialorder %v1260, 20.0
        %vm1344 = vcmp.gt.f32.partialorder %v1264, 20.0
        %vm1345 = vcmp.gt.f32.partialorder %v1266, 20.0
        %vm1346 = vcmp.gt.f32.partialorder %v1268, 20.0
        %vm1347 = vcmp.gt.f32.partialorder %v1270, 20.0
        %vm1348 = vcmp.gt.f32.partialorder %v1274, 20.0
        %vm1349 = vcmp.gt.f32.partialorder %v1276, 20.0
        %vm1350 = vcmp.gt.f32.partialorder %v1278, 20.0
        %vm1351 = vcmp.gt.f32.partialorder %v1280, 20.0
        %vm1352 = vcmp.gt.f32.partialorder %v1284, 20.0
        %vm1353 = vcmp.gt.f32.partialorder %v1286, 20.0
        %vm1354 = vcmp.gt.f32.partialorder %v1288, 20.0
        %vm1355 = vcmp.gt.f32.partialorder %v1290, 20.0
        %v1356 = vmin.f32 %v1134, 20.0
        %v1357 = vmin.f32 %v1136, 20.0
        %v1358 = vmin.f32 %v1138, 20.0
        %v1359 = vmin.f32 %v1140, 20.0
        %v1360 = vmin.f32 %v1144, 20.0
        %v1361 = vmin.f32 %v1146, 20.0
        %v1362 = vmin.f32 %v1148, 20.0
        %v1363 = vmin.f32 %v1150, 20.0
        %v1364 = vmin.f32 %v1154, 20.0
        %v1365 = vmin.f32 %v1156, 20.0
        %v1366 = vmin.f32 %v1158, 20.0
        %v1367 = vmin.f32 %v1160, 20.0
        %v1368 = vmin.f32 %v1164, 20.0
        %v1369 = vmin.f32 %v1166, 20.0
        %v1370 = vmin.f32 %v1168, 20.0
        %v1371 = vmin.f32 %v1170, 20.0
        %v1372 = vmin.f32 %v1174, 20.0
        %v1373 = vmin.f32 %v1176, 20.0
        %v1374 = vmin.f32 %v1178, 20.0
        %v1375 = vmin.f32 %v1180, 20.0
        %v1376 = vmin.f32 %v1184, 20.0
        %v1377 = vmin.f32 %v1186, 20.0
        %v1378 = vmin.f32 %v1188, 20.0
        %v1379 = vmin.f32 %v1190, 20.0
        %v1380 = vmin.f32 %v1194, 20.0
        %v1381 = vmin.f32 %v1196, 20.0
        %v1382 = vmin.f32 %v1198, 20.0
        %v1383 = vmin.f32 %v1200, 20.0
        %v1384 = vmin.f32 %v1204, 20.0
        %v1385 = vmin.f32 %v1206, 20.0
        %v1386 = vmin.f32 %v1208, 20.0
        %v1387 = vmin.f32 %v1210, 20.0
        %v1388 = vmin.f32 %v1214, 20.0
        %v1389 = vmin.f32 %v1216, 20.0
        %v1390 = vmin.f32 %v1218, 20.0
        %v1391 = vmin.f32 %v1220, 20.0
        %v1392 = vmin.f32 %v1224, 20.0
        %v1393 = vmin.f32 %v1226, 20.0
        %v1394 = vmin.f32 %v1228, 20.0
        %v1395 = vmin.f32 %v1230, 20.0
        %v1396 = vmin.f32 %v1234, 20.0
        %v1397 = vmin.f32 %v1236, 20.0
        %v1398 = vmin.f32 %v1238, 20.0
        %v1399 = vmin.f32 %v1240, 20.0
        %v1400 = vmin.f32 %v1244, 20.0
        %v1401 = vmin.f32 %v1246, 20.0
        %v1402 = vmin.f32 %v1248, 20.0
        %v1403 = vmin.f32 %v1250, 20.0
        %v1404 = vmin.f32 %v1254, 20.0
        %v1405 = vmin.f32 %v1256, 20.0
        %v1406 = vmin.f32 %v1258, 20.0
        %v1407 = vmin.f32 %v1260, 20.0
        %v1408 = vmin.f32 %v1264, 20.0
        %v1409 = vmin.f32 %v1266, 20.0
        %v1410 = vmin.f32 %v1268, 20.0
        %v1411 = vmin.f32 %v1270, 20.0
        %v1412 = vmin.f32 %v1274, 20.0
        %v1413 = vmin.f32 %v1276, 20.0
        %v1414 = vmin.f32 %v1278, 20.0
        %v1415 = vmin.f32 %v1280, 20.0
        %v1416 = vmin.f32 %v1284, 20.0
        %v1417 = vmin.f32 %v1286, 20.0
        %v1418 = vmin.f32 %v1288, 20.0
        %v1419 = vmin.f32 %v1290, 20.0
        %v1420 = vmul.f32 %v1356, 1.442695
        %v1421 = vpow.pop %v1420
        %v1422 = vmul.f32 %v1357, 1.442695
        %v1423 = vpow.pop %v1422
        %v1424 = vmul.f32 %v1358, 1.442695
        %v1425 = vpow.pop %v1424
        %v1426 = vmul.f32 %v1359, 1.442695
        %v1427 = vpow.pop %v1426
        %v1428 = vmul.f32 %v1360, 1.442695
        %v1429 = vpow.pop %v1428
        %v1430 = vmul.f32 %v1361, 1.442695
        %v1431 = vpow.pop %v1430
        %v1432 = vmul.f32 %v1362, 1.442695
        %v1433 = vpow.pop %v1432
        %v1434 = vmul.f32 %v1363, 1.442695
        %v1435 = vpow.pop %v1434
        %v1436 = vmul.f32 %v1364, 1.442695
        %v1437 = vpow.pop %v1436
        %v1438 = vmul.f32 %v1365, 1.442695
        %v1439 = vpow.pop %v1438
        %v1440 = vmul.f32 %v1366, 1.442695
        %v1441 = vpow.pop %v1440
        %v1442 = vmul.f32 %v1367, 1.442695
        %v1443 = vpow.pop %v1442
        %v1444 = vmul.f32 %v1368, 1.442695
        %v1445 = vpow.pop %v1444
        %v1446 = vmul.f32 %v1369, 1.442695
        %v1447 = vpow.pop %v1446
        %v1448 = vmul.f32 %v1370, 1.442695
        %v1449 = vpow.pop %v1448
        %v1450 = vmul.f32 %v1371, 1.442695
        %v1451 = vpow.pop %v1450
        %v1452 = vmul.f32 %v1372, 1.442695
        %v1453 = vpow.pop %v1452
        %v1454 = vmul.f32 %v1373, 1.442695
        %v1455 = vpow.pop %v1454
        %v1456 = vmul.f32 %v1374, 1.442695
        %v1457 = vpow.pop %v1456
        %v1458 = vmul.f32 %v1375, 1.442695
        %v1459 = vpow.pop %v1458
        %v1460 = vmul.f32 %v1376, 1.442695
        %v1461 = vpow.pop %v1460
        %v1462 = vmul.f32 %v1377, 1.442695
        %v1463 = vpow.pop %v1462
        %v1464 = vmul.f32 %v1378, 1.442695
        %v1465 = vpow.pop %v1464
        %v1466 = vmul.f32 %v1379, 1.442695
        %v1467 = vpow.pop %v1466
        %v1468 = vmul.f32 %v1380, 1.442695
        %v1469 = vpow.pop %v1468
        %v1470 = vmul.f32 %v1381, 1.442695
        %v1471 = vpow.pop %v1470
        %v1472 = vmul.f32 %v1382, 1.442695
        %v1473 = vpow.pop %v1472
        %v1474 = vmul.f32 %v1383, 1.442695
        %v1475 = vpow.pop %v1474
        %v1476 = vmul.f32 %v1384, 1.442695
        %v1477 = vpow.pop %v1476
        %v1478 = vmul.f32 %v1385, 1.442695
        %v1479 = vpow.pop %v1478
        %v1480 = vmul.f32 %v1386, 1.442695
        %v1481 = vpow.pop %v1480
        %v1482 = vmul.f32 %v1387, 1.442695
        %v1483 = vpow.pop %v1482
        %v1484 = vmul.f32 %v1388, 1.442695
        %v1485 = vpow.pop %v1484
        %v1486 = vmul.f32 %v1389, 1.442695
        %v1487 = vpow.pop %v1486
        %v1488 = vmul.f32 %v1390, 1.442695
        %v1489 = vpow.pop %v1488
        %v1490 = vmul.f32 %v1391, 1.442695
        %v1491 = vpow.pop %v1490
        %v1492 = vmul.f32 %v1392, 1.442695
        %v1493 = vpow.pop %v1492
        %v1494 = vmul.f32 %v1393, 1.442695
        %v1495 = vpow.pop %v1494
        %v1496 = vmul.f32 %v1394, 1.442695
        %v1497 = vpow.pop %v1496
        %v1498 = vmul.f32 %v1395, 1.442695
        %v1499 = vpow.pop %v1498
        %v1500 = vmul.f32 %v1396, 1.442695
        %v1501 = vpow.pop %v1500
        %v1502 = vmul.f32 %v1397, 1.442695
        %v1503 = vpow.pop %v1502
        %v1504 = vmul.f32 %v1398, 1.442695
        %v1505 = vpow.pop %v1504
        %v1506 = vmul.f32 %v1399, 1.442695
        %v1507 = vpow.pop %v1506
        %v1508 = vmul.f32 %v1400, 1.442695
        %v1509 = vpow.pop %v1508
        %v1510 = vmul.f32 %v1401, 1.442695
        %v1511 = vpow.pop %v1510
        %v1512 = vmul.f32 %v1402, 1.442695
        %v1513 = vpow.pop %v1512
        %v1514 = vmul.f32 %v1403, 1.442695
        %v1515 = vpow.pop %v1514
        %v1516 = vmul.f32 %v1404, 1.442695
        %v1517 = vpow.pop %v1516
        %v1518 = vmul.f32 %v1405, 1.442695
        %v1519 = vpow.pop %v1518
        %v1520 = vmul.f32 %v1406, 1.442695
        %v1521 = vpow.pop %v1520
        %v1522 = vmul.f32 %v1407, 1.442695
        %v1523 = vpow.pop %v1522
        %v1524 = vmul.f32 %v1408, 1.442695
        %v1525 = vpow.pop %v1524
        %v1526 = vmul.f32 %v1409, 1.442695
        %v1527 = vpow.pop %v1526
        %v1528 = vmul.f32 %v1410, 1.442695
        %v1529 = vpow.pop %v1528
        %v1530 = vmul.f32 %v1411, 1.442695
        %v1531 = vpow.pop %v1530
        %v1532 = vmul.f32 %v1412, 1.442695
        %v1533 = vpow.pop %v1532
        %v1534 = vmul.f32 %v1413, 1.442695
        %v1535 = vpow.pop %v1534
        %v1536 = vmul.f32 %v1414, 1.442695
        %v1537 = vpow.pop %v1536
        %v1538 = vmul.f32 %v1415, 1.442695
        %v1539 = vpow.pop %v1538
        %v1540 = vmul.f32 %v1416, 1.442695
        %v1541 = vpow.pop %v1540
        %v1542 = vmul.f32 %v1417, 1.442695
        %v1543 = vpow.pop %v1542
        %v1544 = vmul.f32 %v1418, 1.442695
        %v1545 = vpow.pop %v1544
        %v1546 = vmul.f32 %v1419, 1.442695
        %v1547 = vpow.pop %v1546
        %v1548 = vadd.f32 %v1421, 1.0
        %v1549 = vlog2.pop %v1548
        %v1550 = vmul.f32 %v1549, 0.6931472
        %v1551 = vmul.f32 -0.5, %v1421
        %v1552 = vadd.f32 %v1551, 1.0
        %v1553 = vmul.f32 %v1552, %v1421
        %v1554 = vand.u32 2147483647, %v1421
        %vm1555 = vcmp.lt.f32.partialorder %v1554, 0.0004427343
        %v1556 = vsel %vm1555, %v1553, %v1550
        %v1557 = vadd.f32 %v1423, 1.0
        %v1558 = vlog2.pop %v1557
        %v1559 = vmul.f32 %v1558, 0.6931472
        %v1560 = vmul.f32 -0.5, %v1423
        %v1561 = vadd.f32 %v1560, 1.0
        %v1562 = vmul.f32 %v1561, %v1423
        %v1563 = vand.u32 2147483647, %v1423
        %vm1564 = vcmp.lt.f32.partialorder %v1563, 0.0004427343
        %v1565 = vsel %vm1564, %v1562, %v1559
        %v1566 = vadd.f32 %v1425, 1.0
        %v1567 = vlog2.pop %v1566
        %v1568 = vmul.f32 %v1567, 0.6931472
        %v1569 = vmul.f32 -0.5, %v1425
        %v1570 = vadd.f32 %v1569, 1.0
        %v1571 = vmul.f32 %v1570, %v1425
        %v1572 = vand.u32 2147483647, %v1425
        %vm1573 = vcmp.lt.f32.partialorder %v1572, 0.0004427343
        %v1574 = vsel %vm1573, %v1571, %v1568
        %v1575 = vadd.f32 %v1427, 1.0
        %v1576 = vlog2.pop %v1575
        %v1577 = vmul.f32 %v1576, 0.6931472
        %v1578 = vmul.f32 -0.5, %v1427
        %v1579 = vadd.f32 %v1578, 1.0
        %v1580 = vmul.f32 %v1579, %v1427
        %v1581 = vand.u32 2147483647, %v1427
        %vm1582 = vcmp.lt.f32.partialorder %v1581, 0.0004427343
        %v1583 = vsel %vm1582, %v1580, %v1577
        %v1584 = vadd.f32 %v1429, 1.0
        %v1585 = vlog2.pop %v1584
        %v1586 = vmul.f32 %v1585, 0.6931472
        %v1587 = vmul.f32 -0.5, %v1429
        %v1588 = vadd.f32 %v1587, 1.0
        %v1589 = vmul.f32 %v1588, %v1429
        %v1590 = vand.u32 2147483647, %v1429
        %vm1591 = vcmp.lt.f32.partialorder %v1590, 0.0004427343
        %v1592 = vsel %vm1591, %v1589, %v1586
        %v1593 = vadd.f32 %v1431, 1.0
        %v1594 = vlog2.pop %v1593
        %v1595 = vmul.f32 %v1594, 0.6931472
        %v1596 = vmul.f32 -0.5, %v1431
        %v1597 = vadd.f32 %v1596, 1.0
        %v1598 = vmul.f32 %v1597, %v1431
        %v1599 = vand.u32 2147483647, %v1431
        %vm1600 = vcmp.lt.f32.partialorder %v1599, 0.0004427343
        %v1601 = vsel %vm1600, %v1598, %v1595
        %v1602 = vadd.f32 %v1433, 1.0
        %v1603 = vlog2.pop %v1602
        %v1604 = vmul.f32 %v1603, 0.6931472
        %v1605 = vmul.f32 -0.5, %v1433
        %v1606 = vadd.f32 %v1605, 1.0
        %v1607 = vmul.f32 %v1606, %v1433
        %v1608 = vand.u32 2147483647, %v1433
        %vm1609 = vcmp.lt.f32.partialorder %v1608, 0.0004427343
        %v1610 = vsel %vm1609, %v1607, %v1604
        %v1611 = vadd.f32 %v1435, 1.0
        %v1612 = vlog2.pop %v1611
        %v1613 = vmul.f32 %v1612, 0.6931472
        %v1614 = vmul.f32 -0.5, %v1435
        %v1615 = vadd.f32 %v1614, 1.0
        %v1616 = vmul.f32 %v1615, %v1435
        %v1617 = vand.u32 2147483647, %v1435
        %vm1618 = vcmp.lt.f32.partialorder %v1617, 0.0004427343
        %v1619 = vsel %vm1618, %v1616, %v1613
        %v1620 = vadd.f32 %v1437, 1.0
        %v1621 = vlog2.pop %v1620
        %v1622 = vmul.f32 %v1621, 0.6931472
        %v1623 = vmul.f32 -0.5, %v1437
        %v1624 = vadd.f32 %v1623, 1.0
        %v1625 = vmul.f32 %v1624, %v1437
        %v1626 = vand.u32 2147483647, %v1437
        %vm1627 = vcmp.lt.f32.partialorder %v1626, 0.0004427343
        %v1628 = vsel %vm1627, %v1625, %v1622
        %v1629 = vadd.f32 %v1439, 1.0
        %v1630 = vlog2.pop %v1629
        %v1631 = vmul.f32 %v1630, 0.6931472
        %v1632 = vmul.f32 -0.5, %v1439
        %v1633 = vadd.f32 %v1632, 1.0
        %v1634 = vmul.f32 %v1633, %v1439
        %v1635 = vand.u32 2147483647, %v1439
        %vm1636 = vcmp.lt.f32.partialorder %v1635, 0.0004427343
        %v1637 = vsel %vm1636, %v1634, %v1631
        %v1638 = vadd.f32 %v1441, 1.0
        %v1639 = vlog2.pop %v1638
        %v1640 = vmul.f32 %v1639, 0.6931472
        %v1641 = vmul.f32 -0.5, %v1441
        %v1642 = vadd.f32 %v1641, 1.0
        %v1643 = vmul.f32 %v1642, %v1441
        %v1644 = vand.u32 2147483647, %v1441
        %vm1645 = vcmp.lt.f32.partialorder %v1644, 0.0004427343
        %v1646 = vsel %vm1645, %v1643, %v1640
        %v1647 = vadd.f32 %v1443, 1.0
        %v1648 = vlog2.pop %v1647
        %v1649 = vmul.f32 %v1648, 0.6931472
        %v1650 = vmul.f32 -0.5, %v1443
        %v1651 = vadd.f32 %v1650, 1.0
        %v1652 = vmul.f32 %v1651, %v1443
        %v1653 = vand.u32 2147483647, %v1443
        %vm1654 = vcmp.lt.f32.partialorder %v1653, 0.0004427343
        %v1655 = vsel %vm1654, %v1652, %v1649
        %v1656 = vadd.f32 %v1445, 1.0
        %v1657 = vlog2.pop %v1656
        %v1658 = vmul.f32 %v1657, 0.6931472
        %v1659 = vmul.f32 -0.5, %v1445
        %v1660 = vadd.f32 %v1659, 1.0
        %v1661 = vmul.f32 %v1660, %v1445
        %v1662 = vand.u32 2147483647, %v1445
        %vm1663 = vcmp.lt.f32.partialorder %v1662, 0.0004427343
        %v1664 = vsel %vm1663, %v1661, %v1658
        %v1665 = vadd.f32 %v1447, 1.0
        %v1666 = vlog2.pop %v1665
        %v1667 = vmul.f32 %v1666, 0.6931472
        %v1668 = vmul.f32 -0.5, %v1447
        %v1669 = vadd.f32 %v1668, 1.0
        %v1670 = vmul.f32 %v1669, %v1447
        %v1671 = vand.u32 2147483647, %v1447
        %vm1672 = vcmp.lt.f32.partialorder %v1671, 0.0004427343
        %v1673 = vsel %vm1672, %v1670, %v1667
        %v1674 = vadd.f32 %v1449, 1.0
        %v1675 = vlog2.pop %v1674
        %v1676 = vmul.f32 %v1675, 0.6931472
        %v1677 = vmul.f32 -0.5, %v1449
        %v1678 = vadd.f32 %v1677, 1.0
        %v1679 = vmul.f32 %v1678, %v1449
        %v1680 = vand.u32 2147483647, %v1449
        %vm1681 = vcmp.lt.f32.partialorder %v1680, 0.0004427343
        %v1682 = vsel %vm1681, %v1679, %v1676
        %v1683 = vadd.f32 %v1451, 1.0
        %v1684 = vlog2.pop %v1683
        %v1685 = vmul.f32 %v1684, 0.6931472
        %v1686 = vmul.f32 -0.5, %v1451
        %v1687 = vadd.f32 %v1686, 1.0
        %v1688 = vmul.f32 %v1687, %v1451
        %v1689 = vand.u32 2147483647, %v1451
        %vm1690 = vcmp.lt.f32.partialorder %v1689, 0.0004427343
        %v1691 = vsel %vm1690, %v1688, %v1685
        %v1692 = vadd.f32 %v1453, 1.0
        %v1693 = vlog2.pop %v1692
        %v1694 = vmul.f32 %v1693, 0.6931472
        %v1695 = vmul.f32 -0.5, %v1453
        %v1696 = vadd.f32 %v1695, 1.0
        %v1697 = vmul.f32 %v1696, %v1453
        %v1698 = vand.u32 2147483647, %v1453
        %vm1699 = vcmp.lt.f32.partialorder %v1698, 0.0004427343
        %v1700 = vsel %vm1699, %v1697, %v1694
        %v1701 = vadd.f32 %v1455, 1.0
        %v1702 = vlog2.pop %v1701
        %v1703 = vmul.f32 %v1702, 0.6931472
        %v1704 = vmul.f32 -0.5, %v1455
        %v1705 = vadd.f32 %v1704, 1.0
        %v1706 = vmul.f32 %v1705, %v1455
        %v1707 = vand.u32 2147483647, %v1455
        %vm1708 = vcmp.lt.f32.partialorder %v1707, 0.0004427343
        %v1709 = vsel %vm1708, %v1706, %v1703
        %v1710 = vadd.f32 %v1457, 1.0
        %v1711 = vlog2.pop %v1710
        %v1712 = vmul.f32 %v1711, 0.6931472
        %v1713 = vmul.f32 -0.5, %v1457
        %v1714 = vadd.f32 %v1713, 1.0
        %v1715 = vmul.f32 %v1714, %v1457
        %v1716 = vand.u32 2147483647, %v1457
        %vm1717 = vcmp.lt.f32.partialorder %v1716, 0.0004427343
        %v1718 = vsel %vm1717, %v1715, %v1712
        %v1719 = vadd.f32 %v1459, 1.0
        %v1720 = vlog2.pop %v1719
        %v1721 = vmul.f32 %v1720, 0.6931472
        %v1722 = vmul.f32 -0.5, %v1459
        %v1723 = vadd.f32 %v1722, 1.0
        %v1724 = vmul.f32 %v1723, %v1459
        %v1725 = vand.u32 2147483647, %v1459
        %vm1726 = vcmp.lt.f32.partialorder %v1725, 0.0004427343
        %v1727 = vsel %vm1726, %v1724, %v1721
        %v1728 = vadd.f32 %v1461, 1.0
        %v1729 = vlog2.pop %v1728
        %v1730 = vmul.f32 %v1729, 0.6931472
        %v1731 = vmul.f32 -0.5, %v1461
        %v1732 = vadd.f32 %v1731, 1.0
        %v1733 = vmul.f32 %v1732, %v1461
        %v1734 = vand.u32 2147483647, %v1461
        %vm1735 = vcmp.lt.f32.partialorder %v1734, 0.0004427343
        %v1736 = vsel %vm1735, %v1733, %v1730
        %v1737 = vadd.f32 %v1463, 1.0
        %v1738 = vlog2.pop %v1737
        %v1739 = vmul.f32 %v1738, 0.6931472
        %v1740 = vmul.f32 -0.5, %v1463
        %v1741 = vadd.f32 %v1740, 1.0
        %v1742 = vmul.f32 %v1741, %v1463
        %v1743 = vand.u32 2147483647, %v1463
        %vm1744 = vcmp.lt.f32.partialorder %v1743, 0.0004427343
        %v1745 = vsel %vm1744, %v1742, %v1739
        %v1746 = vadd.f32 %v1465, 1.0
        %v1747 = vlog2.pop %v1746
        %v1748 = vmul.f32 %v1747, 0.6931472
        %v1749 = vmul.f32 -0.5, %v1465
        %v1750 = vadd.f32 %v1749, 1.0
        %v1751 = vmul.f32 %v1750, %v1465
        %v1752 = vand.u32 2147483647, %v1465
        %vm1753 = vcmp.lt.f32.partialorder %v1752, 0.0004427343
        %v1754 = vsel %vm1753, %v1751, %v1748
        %v1755 = vadd.f32 %v1467, 1.0
        %v1756 = vlog2.pop %v1755
        %v1757 = vmul.f32 %v1756, 0.6931472
        %v1758 = vmul.f32 -0.5, %v1467
        %v1759 = vadd.f32 %v1758, 1.0
        %v1760 = vmul.f32 %v1759, %v1467
        %v1761 = vand.u32 2147483647, %v1467
        %vm1762 = vcmp.lt.f32.partialorder %v1761, 0.0004427343
        %v1763 = vsel %vm1762, %v1760, %v1757
        %v1764 = vadd.f32 %v1469, 1.0
        %v1765 = vlog2.pop %v1764
        %v1766 = vmul.f32 %v1765, 0.6931472
        %v1767 = vmul.f32 -0.5, %v1469
        %v1768 = vadd.f32 %v1767, 1.0
        %v1769 = vmul.f32 %v1768, %v1469
        %v1770 = vand.u32 2147483647, %v1469
        %vm1771 = vcmp.lt.f32.partialorder %v1770, 0.0004427343
        %v1772 = vsel %vm1771, %v1769, %v1766
        %v1773 = vadd.f32 %v1471, 1.0
        %v1774 = vlog2.pop %v1773
        %v1775 = vmul.f32 %v1774, 0.6931472
        %v1776 = vmul.f32 -0.5, %v1471
        %v1777 = vadd.f32 %v1776, 1.0
        %v1778 = vmul.f32 %v1777, %v1471
        %v1779 = vand.u32 2147483647, %v1471
        %vm1780 = vcmp.lt.f32.partialorder %v1779, 0.0004427343
        %v1781 = vsel %vm1780, %v1778, %v1775
        %v1782 = vadd.f32 %v1473, 1.0
        %v1783 = vlog2.pop %v1782
        %v1784 = vmul.f32 %v1783, 0.6931472
        %v1785 = vmul.f32 -0.5, %v1473
        %v1786 = vadd.f32 %v1785, 1.0
        %v1787 = vmul.f32 %v1786, %v1473
        %v1788 = vand.u32 2147483647, %v1473
        %vm1789 = vcmp.lt.f32.partialorder %v1788, 0.0004427343
        %v1790 = vsel %vm1789, %v1787, %v1784
        %v1791 = vadd.f32 %v1475, 1.0
        %v1792 = vlog2.pop %v1791
        %v1793 = vmul.f32 %v1792, 0.6931472
        %v1794 = vmul.f32 -0.5, %v1475
        %v1795 = vadd.f32 %v1794, 1.0
        %v1796 = vmul.f32 %v1795, %v1475
        %v1797 = vand.u32 2147483647, %v1475
        %vm1798 = vcmp.lt.f32.partialorder %v1797, 0.0004427343
        %v1799 = vsel %vm1798, %v1796, %v1793
        %v1800 = vadd.f32 %v1477, 1.0
        %v1801 = vlog2.pop %v1800
        %v1802 = vmul.f32 %v1801, 0.6931472
        %v1803 = vmul.f32 -0.5, %v1477
        %v1804 = vadd.f32 %v1803, 1.0
        %v1805 = vmul.f32 %v1804, %v1477
        %v1806 = vand.u32 2147483647, %v1477
        %vm1807 = vcmp.lt.f32.partialorder %v1806, 0.0004427343
        %v1808 = vsel %vm1807, %v1805, %v1802
        %v1809 = vadd.f32 %v1479, 1.0
        %v1810 = vlog2.pop %v1809
        %v1811 = vmul.f32 %v1810, 0.6931472
        %v1812 = vmul.f32 -0.5, %v1479
        %v1813 = vadd.f32 %v1812, 1.0
        %v1814 = vmul.f32 %v1813, %v1479
        %v1815 = vand.u32 2147483647, %v1479
        %vm1816 = vcmp.lt.f32.partialorder %v1815, 0.0004427343
        %v1817 = vsel %vm1816, %v1814, %v1811
        %v1818 = vadd.f32 %v1481, 1.0
        %v1819 = vlog2.pop %v1818
        %v1820 = vmul.f32 %v1819, 0.6931472
        %v1821 = vmul.f32 -0.5, %v1481
        %v1822 = vadd.f32 %v1821, 1.0
        %v1823 = vmul.f32 %v1822, %v1481
        %v1824 = vand.u32 2147483647, %v1481
        %vm1825 = vcmp.lt.f32.partialorder %v1824, 0.0004427343
        %v1826 = vsel %vm1825, %v1823, %v1820
        %v1827 = vadd.f32 %v1483, 1.0
        %v1828 = vlog2.pop %v1827
        %v1829 = vmul.f32 %v1828, 0.6931472
        %v1830 = vmul.f32 -0.5, %v1483
        %v1831 = vadd.f32 %v1830, 1.0
        %v1832 = vmul.f32 %v1831, %v1483
        %v1833 = vand.u32 2147483647, %v1483
        %vm1834 = vcmp.lt.f32.partialorder %v1833, 0.0004427343
        %v1835 = vsel %vm1834, %v1832, %v1829
        %v1836 = vadd.f32 %v1485, 1.0
        %v1837 = vlog2.pop %v1836
        %v1838 = vmul.f32 %v1837, 0.6931472
        %v1839 = vmul.f32 -0.5, %v1485
        %v1840 = vadd.f32 %v1839, 1.0
        %v1841 = vmul.f32 %v1840, %v1485
        %v1842 = vand.u32 2147483647, %v1485
        %vm1843 = vcmp.lt.f32.partialorder %v1842, 0.0004427343
        %v1844 = vsel %vm1843, %v1841, %v1838
        %v1845 = vadd.f32 %v1487, 1.0
        %v1846 = vlog2.pop %v1845
        %v1847 = vmul.f32 %v1846, 0.6931472
        %v1848 = vmul.f32 -0.5, %v1487
        %v1849 = vadd.f32 %v1848, 1.0
        %v1850 = vmul.f32 %v1849, %v1487
        %v1851 = vand.u32 2147483647, %v1487
        %vm1852 = vcmp.lt.f32.partialorder %v1851, 0.0004427343
        %v1853 = vsel %vm1852, %v1850, %v1847
        %v1854 = vadd.f32 %v1489, 1.0
        %v1855 = vlog2.pop %v1854
        %v1856 = vmul.f32 %v1855, 0.6931472
        %v1857 = vmul.f32 -0.5, %v1489
        %v1858 = vadd.f32 %v1857, 1.0
        %v1859 = vmul.f32 %v1858, %v1489
        %v1860 = vand.u32 2147483647, %v1489
        %vm1861 = vcmp.lt.f32.partialorder %v1860, 0.0004427343
        %v1862 = vsel %vm1861, %v1859, %v1856
        %v1863 = vadd.f32 %v1491, 1.0
        %v1864 = vlog2.pop %v1863
        %v1865 = vmul.f32 %v1864, 0.6931472
        %v1866 = vmul.f32 -0.5, %v1491
        %v1867 = vadd.f32 %v1866, 1.0
        %v1868 = vmul.f32 %v1867, %v1491
        %v1869 = vand.u32 2147483647, %v1491
        %vm1870 = vcmp.lt.f32.partialorder %v1869, 0.0004427343
        %v1871 = vsel %vm1870, %v1868, %v1865
        %v1872 = vadd.f32 %v1493, 1.0
        %v1873 = vlog2.pop %v1872
        %v1874 = vmul.f32 %v1873, 0.6931472
        %v1875 = vmul.f32 -0.5, %v1493
        %v1876 = vadd.f32 %v1875, 1.0
        %v1877 = vmul.f32 %v1876, %v1493
        %v1878 = vand.u32 2147483647, %v1493
        %vm1879 = vcmp.lt.f32.partialorder %v1878, 0.0004427343
        %v1880 = vsel %vm1879, %v1877, %v1874
        %v1881 = vadd.f32 %v1495, 1.0
        %v1882 = vlog2.pop %v1881
        %v1883 = vmul.f32 %v1882, 0.6931472
        %v1884 = vmul.f32 -0.5, %v1495
        %v1885 = vadd.f32 %v1884, 1.0
        %v1886 = vmul.f32 %v1885, %v1495
        %v1887 = vand.u32 2147483647, %v1495
        %vm1888 = vcmp.lt.f32.partialorder %v1887, 0.0004427343
        %v1889 = vsel %vm1888, %v1886, %v1883
        %v1890 = vadd.f32 %v1497, 1.0
        %v1891 = vlog2.pop %v1890
        %v1892 = vmul.f32 %v1891, 0.6931472
        %v1893 = vmul.f32 -0.5, %v1497
        %v1894 = vadd.f32 %v1893, 1.0
        %v1895 = vmul.f32 %v1894, %v1497
        %v1896 = vand.u32 2147483647, %v1497
        %vm1897 = vcmp.lt.f32.partialorder %v1896, 0.0004427343
        %v1898 = vsel %vm1897, %v1895, %v1892
        %v1899 = vadd.f32 %v1499, 1.0
        %v1900 = vlog2.pop %v1899
        %v1901 = vmul.f32 %v1900, 0.6931472
        %v1902 = vmul.f32 -0.5, %v1499
        %v1903 = vadd.f32 %v1902, 1.0
        %v1904 = vmul.f32 %v1903, %v1499
        %v1905 = vand.u32 2147483647, %v1499
        %vm1906 = vcmp.lt.f32.partialorder %v1905, 0.0004427343
        %v1907 = vsel %vm1906, %v1904, %v1901
        %v1908 = vadd.f32 %v1501, 1.0
        %v1909 = vlog2.pop %v1908
        %v1910 = vmul.f32 %v1909, 0.6931472
        %v1911 = vmul.f32 -0.5, %v1501
        %v1912 = vadd.f32 %v1911, 1.0
        %v1913 = vmul.f32 %v1912, %v1501
        %v1914 = vand.u32 2147483647, %v1501
        %vm1915 = vcmp.lt.f32.partialorder %v1914, 0.0004427343
        %v1916 = vsel %vm1915, %v1913, %v1910
        %v1917 = vadd.f32 %v1503, 1.0
        %v1918 = vlog2.pop %v1917
        %v1919 = vmul.f32 %v1918, 0.6931472
        %v1920 = vmul.f32 -0.5, %v1503
        %v1921 = vadd.f32 %v1920, 1.0
        %v1922 = vmul.f32 %v1921, %v1503
        %v1923 = vand.u32 2147483647, %v1503
        %vm1924 = vcmp.lt.f32.partialorder %v1923, 0.0004427343
        %v1925 = vsel %vm1924, %v1922, %v1919
        %v1926 = vadd.f32 %v1505, 1.0
        %v1927 = vlog2.pop %v1926
        %v1928 = vmul.f32 %v1927, 0.6931472
        %v1929 = vmul.f32 -0.5, %v1505
        %v1930 = vadd.f32 %v1929, 1.0
        %v1931 = vmul.f32 %v1930, %v1505
        %v1932 = vand.u32 2147483647, %v1505
        %vm1933 = vcmp.lt.f32.partialorder %v1932, 0.0004427343
        %v1934 = vsel %vm1933, %v1931, %v1928
        %v1935 = vadd.f32 %v1507, 1.0
        %v1936 = vlog2.pop %v1935
        %v1937 = vmul.f32 %v1936, 0.6931472
        %v1938 = vmul.f32 -0.5, %v1507
        %v1939 = vadd.f32 %v1938, 1.0
        %v1940 = vmul.f32 %v1939, %v1507
        %v1941 = vand.u32 2147483647, %v1507
        %vm1942 = vcmp.lt.f32.partialorder %v1941, 0.0004427343
        %v1943 = vsel %vm1942, %v1940, %v1937
        %v1944 = vadd.f32 %v1509, 1.0
        %v1945 = vlog2.pop %v1944
        %v1946 = vmul.f32 %v1945, 0.6931472
        %v1947 = vmul.f32 -0.5, %v1509
        %v1948 = vadd.f32 %v1947, 1.0
        %v1949 = vmul.f32 %v1948, %v1509
        %v1950 = vand.u32 2147483647, %v1509
        %vm1951 = vcmp.lt.f32.partialorder %v1950, 0.0004427343
        %v1952 = vsel %vm1951, %v1949, %v1946
        %v1953 = vadd.f32 %v1511, 1.0
        %v1954 = vlog2.pop %v1953
        %v1955 = vmul.f32 %v1954, 0.6931472
        %v1956 = vmul.f32 -0.5, %v1511
        %v1957 = vadd.f32 %v1956, 1.0
        %v1958 = vmul.f32 %v1957, %v1511
        %v1959 = vand.u32 2147483647, %v1511
        %vm1960 = vcmp.lt.f32.partialorder %v1959, 0.0004427343
        %v1961 = vsel %vm1960, %v1958, %v1955
        %v1962 = vadd.f32 %v1513, 1.0
        %v1963 = vlog2.pop %v1962
        %v1964 = vmul.f32 %v1963, 0.6931472
        %v1965 = vmul.f32 -0.5, %v1513
        %v1966 = vadd.f32 %v1965, 1.0
        %v1967 = vmul.f32 %v1966, %v1513
        %v1968 = vand.u32 2147483647, %v1513
        %vm1969 = vcmp.lt.f32.partialorder %v1968, 0.0004427343
        %v1970 = vsel %vm1969, %v1967, %v1964
        %v1971 = vadd.f32 %v1515, 1.0
        %v1972 = vlog2.pop %v1971
        %v1973 = vmul.f32 %v1972, 0.6931472
        %v1974 = vmul.f32 -0.5, %v1515
        %v1975 = vadd.f32 %v1974, 1.0
        %v1976 = vmul.f32 %v1975, %v1515
        %v1977 = vand.u32 2147483647, %v1515
        %vm1978 = vcmp.lt.f32.partialorder %v1977, 0.0004427343
        %v1979 = vsel %vm1978, %v1976, %v1973
        %v1980 = vadd.f32 %v1517, 1.0
        %v1981 = vlog2.pop %v1980
        %v1982 = vmul.f32 %v1981, 0.6931472
        %v1983 = vmul.f32 -0.5, %v1517
        %v1984 = vadd.f32 %v1983, 1.0
        %v1985 = vmul.f32 %v1984, %v1517
        %v1986 = vand.u32 2147483647, %v1517
        %vm1987 = vcmp.lt.f32.partialorder %v1986, 0.0004427343
        %v1988 = vsel %vm1987, %v1985, %v1982
        %v1989 = vadd.f32 %v1519, 1.0
        %v1990 = vlog2.pop %v1989
        %v1991 = vmul.f32 %v1990, 0.6931472
        %v1992 = vmul.f32 -0.5, %v1519
        %v1993 = vadd.f32 %v1992, 1.0
        %v1994 = vmul.f32 %v1993, %v1519
        %v1995 = vand.u32 2147483647, %v1519
        %vm1996 = vcmp.lt.f32.partialorder %v1995, 0.0004427343
        %v1997 = vsel %vm1996, %v1994, %v1991
        %v1998 = vadd.f32 %v1521, 1.0
        %v1999 = vlog2.pop %v1998
        %v2000 = vmul.f32 %v1999, 0.6931472
        %v2001 = vmul.f32 -0.5, %v1521
        %v2002 = vadd.f32 %v2001, 1.0
        %v2003 = vmul.f32 %v2002, %v1521
        %v2004 = vand.u32 2147483647, %v1521
        %vm2005 = vcmp.lt.f32.partialorder %v2004, 0.0004427343
        %v2006 = vsel %vm2005, %v2003, %v2000
        %v2007 = vadd.f32 %v1523, 1.0
        %v2008 = vlog2.pop %v2007
        %v2009 = vmul.f32 %v2008, 0.6931472
        %v2010 = vmul.f32 -0.5, %v1523
        %v2011 = vadd.f32 %v2010, 1.0
        %v2012 = vmul.f32 %v2011, %v1523
        %v2013 = vand.u32 2147483647, %v1523
        %vm2014 = vcmp.lt.f32.partialorder %v2013, 0.0004427343
        %v2015 = vsel %vm2014, %v2012, %v2009
        %v2016 = vadd.f32 %v1525, 1.0
        %v2017 = vlog2.pop %v2016
        %v2018 = vmul.f32 %v2017, 0.6931472
        %v2019 = vmul.f32 -0.5, %v1525
        %v2020 = vadd.f32 %v2019, 1.0
        %v2021 = vmul.f32 %v2020, %v1525
        %v2022 = vand.u32 2147483647, %v1525
        %vm2023 = vcmp.lt.f32.partialorder %v2022, 0.0004427343
        %v2024 = vsel %vm2023, %v2021, %v2018
        %v2025 = vadd.f32 %v1527, 1.0
        %v2026 = vlog2.pop %v2025
        %v2027 = vmul.f32 %v2026, 0.6931472
        %v2028 = vmul.f32 -0.5, %v1527
        %v2029 = vadd.f32 %v2028, 1.0
        %v2030 = vmul.f32 %v2029, %v1527
        %v2031 = vand.u32 2147483647, %v1527
        %vm2032 = vcmp.lt.f32.partialorder %v2031, 0.0004427343
        %v2033 = vsel %vm2032, %v2030, %v2027
        %v2034 = vadd.f32 %v1529, 1.0
        %v2035 = vlog2.pop %v2034
        %v2036 = vmul.f32 %v2035, 0.6931472
        %v2037 = vmul.f32 -0.5, %v1529
        %v2038 = vadd.f32 %v2037, 1.0
        %v2039 = vmul.f32 %v2038, %v1529
        %v2040 = vand.u32 2147483647, %v1529
        %vm2041 = vcmp.lt.f32.partialorder %v2040, 0.0004427343
        %v2042 = vsel %vm2041, %v2039, %v2036
        %v2043 = vadd.f32 %v1531, 1.0
        %v2044 = vlog2.pop %v2043
        %v2045 = vmul.f32 %v2044, 0.6931472
        %v2046 = vmul.f32 -0.5, %v1531
        %v2047 = vadd.f32 %v2046, 1.0
        %v2048 = vmul.f32 %v2047, %v1531
        %v2049 = vand.u32 2147483647, %v1531
        %vm2050 = vcmp.lt.f32.partialorder %v2049, 0.0004427343
        %v2051 = vsel %vm2050, %v2048, %v2045
        %v2052 = vadd.f32 %v1533, 1.0
        %v2053 = vlog2.pop %v2052
        %v2054 = vmul.f32 %v2053, 0.6931472
        %v2055 = vmul.f32 -0.5, %v1533
        %v2056 = vadd.f32 %v2055, 1.0
        %v2057 = vmul.f32 %v2056, %v1533
        %v2058 = vand.u32 2147483647, %v1533
        %vm2059 = vcmp.lt.f32.partialorder %v2058, 0.0004427343
        %v2060 = vsel %vm2059, %v2057, %v2054
        %v2061 = vadd.f32 %v1535, 1.0
        %v2062 = vlog2.pop %v2061
        %v2063 = vmul.f32 %v2062, 0.6931472
        %v2064 = vmul.f32 -0.5, %v1535
        %v2065 = vadd.f32 %v2064, 1.0
        %v2066 = vmul.f32 %v2065, %v1535
        %v2067 = vand.u32 2147483647, %v1535
        %vm2068 = vcmp.lt.f32.partialorder %v2067, 0.0004427343
        %v2069 = vsel %vm2068, %v2066, %v2063
        %v2070 = vadd.f32 %v1537, 1.0
        %v2071 = vlog2.pop %v2070
        %v2072 = vmul.f32 %v2071, 0.6931472
        %v2073 = vmul.f32 -0.5, %v1537
        %v2074 = vadd.f32 %v2073, 1.0
        %v2075 = vmul.f32 %v2074, %v1537
        %v2076 = vand.u32 2147483647, %v1537
        %vm2077 = vcmp.lt.f32.partialorder %v2076, 0.0004427343
        %v2078 = vsel %vm2077, %v2075, %v2072
        %v2079 = vadd.f32 %v1539, 1.0
        %v2080 = vlog2.pop %v2079
        %v2081 = vmul.f32 %v2080, 0.6931472
        %v2082 = vmul.f32 -0.5, %v1539
        %v2083 = vadd.f32 %v2082, 1.0
        %v2084 = vmul.f32 %v2083, %v1539
        %v2085 = vand.u32 2147483647, %v1539
        %vm2086 = vcmp.lt.f32.partialorder %v2085, 0.0004427343
        %v2087 = vsel %vm2086, %v2084, %v2081
        %v2088 = vadd.f32 %v1541, 1.0
        %v2089 = vlog2.pop %v2088
        %v2090 = vmul.f32 %v2089, 0.6931472
        %v2091 = vmul.f32 -0.5, %v1541
        %v2092 = vadd.f32 %v2091, 1.0
        %v2093 = vmul.f32 %v2092, %v1541
        %v2094 = vand.u32 2147483647, %v1541
        %vm2095 = vcmp.lt.f32.partialorder %v2094, 0.0004427343
        %v2096 = vsel %vm2095, %v2093, %v2090
        %v2097 = vadd.f32 %v1543, 1.0
        %v2098 = vlog2.pop %v2097
        %v2099 = vmul.f32 %v2098, 0.6931472
        %v2100 = vmul.f32 -0.5, %v1543
        %v2101 = vadd.f32 %v2100, 1.0
        %v2102 = vmul.f32 %v2101, %v1543
        %v2103 = vand.u32 2147483647, %v1543
        %vm2104 = vcmp.lt.f32.partialorder %v2103, 0.0004427343
        %v2105 = vsel %vm2104, %v2102, %v2099
        %v2106 = vadd.f32 %v1545, 1.0
        %v2107 = vlog2.pop %v2106
        %v2108 = vmul.f32 %v2107, 0.6931472
        %v2109 = vmul.f32 -0.5, %v1545
        %v2110 = vadd.f32 %v2109, 1.0
        %v2111 = vmul.f32 %v2110, %v1545
        %v2112 = vand.u32 2147483647, %v1545
        %vm2113 = vcmp.lt.f32.partialorder %v2112, 0.0004427343
        %v2114 = vsel %vm2113, %v2111, %v2108
        %v2115 = vadd.f32 %v1547, 1.0
        %v2116 = vlog2.pop %v2115
        %v2117 = vmul.f32 %v2116, 0.6931472
        %v2118 = vmul.f32 -0.5, %v1547
        %v2119 = vadd.f32 %v2118, 1.0
        %v2120 = vmul.f32 %v2119, %v1547
        %v2121 = vand.u32 2147483647, %v1547
        %vm2122 = vcmp.lt.f32.partialorder %v2121, 0.0004427343
        %v2123 = vsel %vm2122, %v2120, %v2117
        %v2124 = vsel %vm1292, %v1134, %v1556
        %v2125 = vsel %vm1293, %v1136, %v1565
        %v2126 = vsel %vm1294, %v1138, %v1574
        %v2127 = vsel %vm1295, %v1140, %v1583
        %v2128 = vsel %vm1296, %v1144, %v1592
        %v2129 = vsel %vm1297, %v1146, %v1601
        %v2130 = vsel %vm1298, %v1148, %v1610
        %v2131 = vsel %vm1299, %v1150, %v1619
        %v2132 = vsel %vm1300, %v1154, %v1628
        %v2133 = vsel %vm1301, %v1156, %v1637
        %v2134 = vsel %vm1302, %v1158, %v1646
        %v2135 = vsel %vm1303, %v1160, %v1655
        %v2136 = vsel %vm1304, %v1164, %v1664
        %v2137 = vsel %vm1305, %v1166, %v1673
        %v2138 = vsel %vm1306, %v1168, %v1682
        %v2139 = vsel %vm1307, %v1170, %v1691
        %v2140 = vsel %vm1308, %v1174, %v1700
        %v2141 = vsel %vm1309, %v1176, %v1709
        %v2142 = vsel %vm1310, %v1178, %v1718
        %v2143 = vsel %vm1311, %v1180, %v1727
        %v2144 = vsel %vm1312, %v1184, %v1736
        %v2145 = vsel %vm1313, %v1186, %v1745
        %v2146 = vsel %vm1314, %v1188, %v1754
        %v2147 = vsel %vm1315, %v1190, %v1763
        %v2148 = vsel %vm1316, %v1194, %v1772
        %v2149 = vsel %vm1317, %v1196, %v1781
        %v2150 = vsel %vm1318, %v1198, %v1790
        %v2151 = vsel %vm1319, %v1200, %v1799
        %v2152 = vsel %vm1320, %v1204, %v1808
        %v2153 = vsel %vm1321, %v1206, %v1817
        %v2154 = vsel %vm1322, %v1208, %v1826
        %v2155 = vsel %vm1323, %v1210, %v1835
        %v2156 = vsel %vm1324, %v1214, %v1844
        %v2157 = vsel %vm1325, %v1216, %v1853
        %v2158 = vsel %vm1326, %v1218, %v1862
        %v2159 = vsel %vm1327, %v1220, %v1871
        %v2160 = vsel %vm1328, %v1224, %v1880
        %v2161 = vsel %vm1329, %v1226, %v1889
        %v2162 = vsel %vm1330, %v1228, %v1898
        %v2163 = vsel %vm1331, %v1230, %v1907
        %v2164 = vsel %vm1332, %v1234, %v1916
        %v2165 = vsel %vm1333, %v1236, %v1925
        %v2166 = vsel %vm1334, %v1238, %v1934
        %v2167 = vsel %vm1335, %v1240, %v1943
        %v2168 = vsel %vm1336, %v1244, %v1952
        %v2169 = vsel %vm1337, %v1246, %v1961
        %v2170 = vsel %vm1338, %v1248, %v1970
        %v2171 = vsel %vm1339, %v1250, %v1979
        %v2172 = vsel %vm1340, %v1254, %v1988
        %v2173 = vsel %vm1341, %v1256, %v1997
        %v2174 = vsel %vm1342, %v1258, %v2006
        %v2175 = vsel %vm1343, %v1260, %v2015
        %v2176 = vsel %vm1344, %v1264, %v2024
        %v2177 = vsel %vm1345, %v1266, %v2033
        %v2178 = vsel %vm1346, %v1268, %v2042
        %v2179 = vsel %vm1347, %v1270, %v2051
        %v2180 = vsel %vm1348, %v1274, %v2060
        %v2181 = vsel %vm1349, %v1276, %v2069
        %v2182 = vsel %vm1350, %v1278, %v2078
        %v2183 = vsel %vm1351, %v1280, %v2087
        %v2184 = vsel %vm1352, %v1284, %v2096
        %v2185 = vsel %vm1353, %v1286, %v2105
        %v2186 = vsel %vm1354, %v1288, %v2114
        %v2187 = vsel %vm1355, %v1290, %v2123
        %2188 = vst [vmem:[%s263] sm:$0xff] %v2124
        %2189 = vst [vmem:[%s263 + $0x8] sm:$0xff] %v2125
        %2190 = vst [vmem:[%s263 + $0x10] sm:$0xff] %v2126
        %2191 = vst [vmem:[%s263 + $0x18] sm:$0xff] %v2127
        %2192 = vst [vmem:[%s263 + $0x20] sm:$0xff] %v2128
        %2193 = vst [vmem:[%s263 + $0x28] sm:$0xff] %v2129
        %2194 = vst [vmem:[%s263 + $0x30] sm:$0xff] %v2130
        %2195 = vst [vmem:[%s263 + $0x38] sm:$0xff] %v2131
        %2196 = vst [vmem:[%s263 + $0x40] sm:$0xff] %v2132
        %2197 = vst [vmem:[%s263 + $0x48] sm:$0xff] %v2133
        %2198 = vst [vmem:[%s263 + $0x50] sm:$0xff] %v2134
        %2199 = vst [vmem:[%s263 + $0x58] sm:$0xff] %v2135
        %2200 = vst [vmem:[%s263 + $0x60] sm:$0xff] %v2136
        %2201 = vst [vmem:[%s263 + $0x68] sm:$0xff] %v2137
        %2202 = vst [vmem:[%s263 + $0x70] sm:$0xff] %v2138
        %2203 = vst [vmem:[%s263 + $0x78] sm:$0xff] %v2139
        %2204 = vst [vmem:[%s263 + $0x80] sm:$0xff] %v2140
        %2205 = vst [vmem:[%s263 + $0x88] sm:$0xff] %v2141
        %2206 = vst [vmem:[%s263 + $0x90] sm:$0xff] %v2142
        %2207 = vst [vmem:[%s263 + $0x98] sm:$0xff] %v2143
        %2208 = vst [vmem:[%s263 + $0xa0] sm:$0xff] %v2144
        %2209 = vst [vmem:[%s263 + $0xa8] sm:$0xff] %v2145
        %2210 = vst [vmem:[%s263 + $0xb0] sm:$0xff] %v2146
        %2211 = vst [vmem:[%s263 + $0xb8] sm:$0xff] %v2147
        %2212 = vst [vmem:[%s263 + $0xc0] sm:$0xff] %v2148
        %2213 = vst [vmem:[%s263 + $0xc8] sm:$0xff] %v2149
        %2214 = vst [vmem:[%s263 + $0xd0] sm:$0xff] %v2150
        %2215 = vst [vmem:[%s263 + $0xd8] sm:$0xff] %v2151
        %2216 = vst [vmem:[%s263 + $0xe0] sm:$0xff] %v2152
        %2217 = vst [vmem:[%s263 + $0xe8] sm:$0xff] %v2153
        %2218 = vst [vmem:[%s263 + $0xf0] sm:$0xff] %v2154
        %2219 = vst [vmem:[%s263 + $0xf8] sm:$0xff] %v2155
        %2220 = vst [vmem:[%s263 + $0x100] sm:$0xff] %v2156
        %2221 = vst [vmem:[%s263 + $0x108] sm:$0xff] %v2157
        %2222 = vst [vmem:[%s263 + $0x110] sm:$0xff] %v2158
        %2223 = vst [vmem:[%s263 + $0x118] sm:$0xff] %v2159
        %2224 = vst [vmem:[%s263 + $0x120] sm:$0xff] %v2160
        %2225 = vst [vmem:[%s263 + $0x128] sm:$0xff] %v2161
        %2226 = vst [vmem:[%s263 + $0x130] sm:$0xff] %v2162
        %2227 = vst [vmem:[%s263 + $0x138] sm:$0xff] %v2163
        %2228 = vst [vmem:[%s263 + $0x140] sm:$0xff] %v2164
        %2229 = vst [vmem:[%s263 + $0x148] sm:$0xff] %v2165
        %2230 = vst [vmem:[%s263 + $0x150] sm:$0xff] %v2166
        %2231 = vst [vmem:[%s263 + $0x158] sm:$0xff] %v2167
        %2232 = vst [vmem:[%s263 + $0x160] sm:$0xff] %v2168
        %2233 = vst [vmem:[%s263 + $0x168] sm:$0xff] %v2169
        %2234 = vst [vmem:[%s263 + $0x170] sm:$0xff] %v2170
        %2235 = vst [vmem:[%s263 + $0x178] sm:$0xff] %v2171
        %2236 = vst [vmem:[%s263 + $0x180] sm:$0xff] %v2172
        %2237 = vst [vmem:[%s263 + $0x188] sm:$0xff] %v2173
        %2238 = vst [vmem:[%s263 + $0x190] sm:$0xff] %v2174
        %2239 = vst [vmem:[%s263 + $0x198] sm:$0xff] %v2175
        %2240 = vst [vmem:[%s263 + $0x1a0] sm:$0xff] %v2176
        %2241 = vst [vmem:[%s263 + $0x1a8] sm:$0xff] %v2177
        %2242 = vst [vmem:[%s263 + $0x1b0] sm:$0xff] %v2178
        %2243 = vst [vmem:[%s263 + $0x1b8] sm:$0xff] %v2179
        %2244 = vst [vmem:[%s263 + $0x1c0] sm:$0xff] %v2180
        %2245 = vst [vmem:[%s263 + $0x1c8] sm:$0xff] %v2181
        %2246 = vst [vmem:[%s263 + $0x1d0] sm:$0xff] %v2182
        %2247 = vst [vmem:[%s263 + $0x1d8] sm:$0xff] %v2183
        %2248 = vst [vmem:[%s263 + $0x1e0] sm:$0xff] %v2184
        %2249 = vst [vmem:[%s263 + $0x1e8] sm:$0xff] %v2185
        %2250 = vst [vmem:[%s263 + $0x1f0] sm:$0xff] %v2186
        %2251 = vst [vmem:[%s263 + $0x1f8] sm:$0xff] %v2187
        %s2252 = sand.u32 %s132, 1
        %s2253 = scalar_lea.sflag [#allocation4], %s2252
        %s2254 = sand.u32 %s132, 1
        %s2255 = smul.addr %s2254, 512
        %s2256 = scalar_lea.vmem [#allocation7], %s2255
        // Predicated region
        $region41: #{tpu_custom_call.1} parent=31 // pred_check
          %p2257 = pneg %p142
        $region42: #{tpu_custom_call.1} parent=31 // pred_check_branch
          %2259 = sbr.rel (%p2257) target = $region44
        $region43: #{tpu_custom_call.1} parent=31 // pred_region
          %s2260 = smul.u32 32, %s26
          %s2261 = smul.u32 2, %s27
          %s2262 = ssub.s32 38, %s2260
          %p2263 = scmp.lt.s32.totalorder %s2262, 32
          %s2264 = scalar_select %p2263, %s2262, 32
          %s2265 = smul.u32 128, %s2264
          %s2266 = smul.u32 %s2265, 2
          %s2268 = ssub.s32 8192, %s2266
          %2269 = vsyncadd %s2253, %s2268
          %p2270 = scmp.ne.s32.totalorder 0, %s2266
          %s2271 = smul.addr %s2260, 2
          %s2272 = sadd.s32 %s2261, %s2271
          %s2273 = smul.addr %s2272, 128
          %s2274 = scalar_lea.hbm %s3, %s2273
          %s2275 = smul.u32 16, %s2264
          %s2276 = sshll.u32 %s2256, 4
          %s2277 = int_to_ptr.vmem [resolvable:$true] %s2276
          %s2278 = sshll.u32 %s2275, 4
          %2282 = dma.vmem_to_hbm [thread:$0]  (%p2270), %s2277, %s2278, %s2274, %s2253, 256, 256, 16
        $region44: #{tpu_custom_call.1} parent=31 // pred_fallthru
          _
      $region32: #{tpu_custom_call.1} parent=5 // pred_fallthru
        _
      %p2283 = scmp.le.s32.totalorder 2, %s16
      // Predicated region
      $region45: #{tpu_custom_call.1} parent=5 // pred_check
        %p2284 = pneg %p2283
      $region46: #{tpu_custom_call.1} parent=5 // pred_check_branch
        %2286 = sbr.rel (%p2284) target = $region48
      $region47: #{tpu_custom_call.1} parent=5 // pred_region
        %s2287 = ssub.s32 %s16, 2
        // Predicated region
        $region49: #{tpu_custom_call.1} parent=47 // pred_check
          %p2288 = pneg %p148
        $region50: #{tpu_custom_call.1} parent=47 // pred_check_branch
          %2290 = sbr.rel (%p2288) target = $region52
        $region51: #{tpu_custom_call.1} parent=47 // pred_region
          %s2291 = sand.u32 %s133, 1
          %s2292 = scalar_lea.sflag [#allocation4], %s2291
          %s2293 = sand.u32 %s133, 1
          %s2294 = smul.addr %s2293, 512
          %s2295 = scalar_lea.vmem [#allocation7], %s2294
          %2296 = dma.done %s2292, 8192
        $region52: #{tpu_custom_call.1} parent=47 // pred_fallthru
          _
      $region48: #{tpu_custom_call.1} parent=5 // pred_fallthru
        _
    $region6: #{tpu_custom_call.1} parent=1 // loop_footer
      %s20 = sadd.s32 1, %s16
    $region7: #{tpu_custom_call.1} parent=1 // loop_footer_branch
      %15 = sbr.rel target = $region3
    $region8: #{tpu_custom_call.1} parent=1 // loop_exit
      _
    %2297 = vsyncpa [#allocation3], 1
    %s2298 = scalar_lea.sflag [#allocation3], 1
    %2299 = vsyncpa %s2298, 1
    %2300 = vsyncpa [#allocation6], 1
    %2301 = vsyncpa [#allocation4], 1
    %s2302 = scalar_lea.sflag [#allocation4], 1
    %2303 = vsyncpa %s2302, 1

</llo_original>
